<compile_context>
chip_gen: v7x
topology: tpu7x:2x2x1
jax: 0.10.0
libtpu: 0.0.40
codegen_flags: <defaults>
</compile_context>

<pallas_src>
import jax
import jax.numpy as jnp
from jax.experimental import pallas as pl
from jax.experimental.pallas import tpu as pltpu

BN_EPS = 1e-5


# ----------------------------------------------------------------------------
# Stage 1: projections + mlp2 head (BN folded), per batch tile.
# ----------------------------------------------------------------------------
def clip_head_kernel(
    i_f_ref, t_f_ref,          # encoder feature tiles (bf16)
    w_i1_ref,                  # W_i @ W1_i folded            (image_dim, H)  bf16
    w_t_ref,                   # text projection W_t          (768, d_t)      bf16
    w1t_ref,                   # text half of mlp2 Linear #1  (d_t, H)        bf16
    w2_ref,                    # mlp2 Linear #2 with BN1 folded (H, H)        bf16
    w3_ref,                    # mlp2 Linear #3 with BN2 folded (H, d_t)      bf16
    bias_ref,                  # packed [b1 | b2f | b3f]      (1, 2H + d_t)   f32
    mlp_out_ref,               # out: mlp2(concat(I_e, T_e))  (tile_b, d_t)   bf16
    t_e_ref,                   # out: text embedding T_e      (tile_b, d_t)   bf16
):
    f32, bf16 = jnp.float32, jnp.bfloat16
    H = w2_ref.shape[1]
    d_t = w3_ref.shape[1]

    i_f = i_f_ref[...].astype(bf16)
    t_f = t_f_ref[...].astype(bf16)

    b1 = bias_ref[:, 0:H]
    b2 = bias_ref[:, H:2 * H]
    b3 = bias_ref[:, 2 * H:2 * H + d_t]

    # --- text projection: T_e = T_f @ W_t (f32 accumulation) ---
    t_e = jnp.dot(t_f, w_t_ref[...], preferred_element_type=f32)

    # --- mlp2 layer 1 over concat([I_e, T_e], dim=1), I_e matmul folded:
    #     concat(I_e, T_e) @ W1 == I_f @ (W_i @ W1_i) + T_e @ W1_t
    h = (jnp.dot(i_f, w_i1_ref[...], preferred_element_type=f32)
         + jnp.dot(t_e.astype(bf16), w1t_ref[...], preferred_element_type=f32)
         + b1)
    h = jnp.maximum(h, 0.0)                                    # ReLU (BN1 folded into W2/b2)

    # --- mlp2 layer 2 (BN1 pre-folded) ---
    h = jnp.dot(h.astype(bf16), w2_ref[...], preferred_element_type=f32) + b2
    h = jnp.maximum(h, 0.0)                                    # ReLU (BN2 folded into W3/b3)
    # Dropout(0.2): identity in eval mode

    # --- mlp2 layer 3 (BN2 pre-folded) ---
    mlp = jnp.dot(h.astype(bf16), w3_ref[...], preferred_element_type=f32) + b3

    mlp_out_ref[...] = mlp.astype(mlp_out_ref.dtype)
    t_e_ref[...] = t_e.astype(t_e_ref.dtype)


# ----------------------------------------------------------------------------
# Stage 2: contrastive logits, 2-D tiled:  logits[i, j] = mlp_out_i @ t_e_j.T
# ----------------------------------------------------------------------------
def logits_kernel(mlp_ref, te_ref, out_ref):
    # Contraction on the feature axis of both operands (rhs-transposed matmul);
    # avoids materializing t_e.T.  (Checked: no separate XLU relayout needed at
    # these tile sizes — revisit with pl.lower_as_mlir if tiles change.)
    out_ref[...] = jax.lax.dot_general(
        mlp_ref[...], te_ref[...],
        (((1,), (1,)), ((), ())),
        preferred_element_type=jnp.float32)


# ----------------------------------------------------------------------------
# Host-side parameter folding / packing (done once, outside the kernel).
# ----------------------------------------------------------------------------
def pack_params(p):
    f32, bf16 = jnp.float32, jnp.bfloat16

    # Fold eval-mode BN1 into Linear #2:  y = (relu1 * s1 + shift1) @ W2 + b2
    s1 = p["g1"] * jax.lax.rsqrt(p["v1"] + BN_EPS)             # (1, H)
    shift1 = p["beta1"] - p["m1"] * s1
    w2f = s1.reshape(-1, 1) * p["W2"]
    b2f = shift1 @ p["W2"] + p["b2"]

    # Fold eval-mode BN2 into Linear #3.
    s2 = p["g2"] * jax.lax.rsqrt(p["v2"] + BN_EPS)
    shift2 = p["beta2"] - p["m2"] * s2
    w3f = s2.reshape(-1, 1) * p["W3"]
    b3f = shift2 @ p["W3"] + p["b3"]

    # Fold the image projection into the image half of Linear #1.
    w_i1 = p["W_i"] @ p["W1_i"]                                # (image_dim, H)

    # Pack the three bias vectors into one lane-aligned row -> one DMA.
    bias = jnp.concatenate([p["b1"], b2f, b3f], axis=1).astype(f32)

    return {
        "W_i1": w_i1.astype(bf16),
        "W_t": p["W_t"].astype(bf16),
        "W1_t": p["W1_t"].astype(bf16),
        "W2f": w2f.astype(bf16),
        "W3f": w3f.astype(bf16),
        "bias": bias,
    }


def _round_up(x, m):
    return ((x + m - 1) // m) * m


def _vmem_limit(est_bytes):
    # Explicit scoped-VMEM budget: at least the v5e default (16 MiB), at most
    # a value safe for v7x's 64 MiB physical VMEM.
    return int(max(16 * 1024 * 1024, min(48 * 1024 * 1024, 2 * est_bytes)))


# ----------------------------------------------------------------------------
# Wrapper: batch-tiled two-stage forward.
# ----------------------------------------------------------------------------
def clip_next_forward(i_f, t_f, packed):
    B, img_dim = i_f.shape
    txt_dim = t_f.shape[1]
    H = packed["W2f"].shape[1]
    d_t = packed["W3f"].shape[1]
    bf16, f32 = jnp.bfloat16, jnp.float32

    # ----- batch tiling (256-row tiles fill the v6e/v7x MXU; pad small B) -----
    tile_b = 256 if B >= 256 else _round_up(B, 8)
    Bp = _round_up(B, tile_b)
    if Bp != B:
        i_f = jnp.pad(i_f, ((0, Bp - B), (0, 0)))
        t_f = jnp.pad(t_f, ((0, Bp - B), (0, 0)))
    grid1 = (Bp // tile_b,)

    weight_keys = ("W_i1", "W_t", "W1_t", "W2f", "W3f", "bias")
    weights = [packed[k] for k in weight_keys]
    weight_bytes = sum(int(w.size) * w.dtype.itemsize for w in weights)

    feat_itemsize = i_f.dtype.itemsize
    flops1 = 2 * Bp * (txt_dim * d_t + img_dim * H + d_t * H + H * H + H * d_t)
    bytes1 = (weight_bytes
              + Bp * (img_dim + txt_dim) * feat_itemsize
              + 2 * Bp * d_t * 2)
    vmem1 = (weight_bytes
             + 2 * tile_b * (img_dim + txt_dim) * feat_itemsize   # double-buffered inputs
             + 2 * 2 * tile_b * d_t * 2                           # double-buffered outputs
             + (1 << 20))

    mlp_out, t_e = pl.pallas_call(
        clip_head_kernel,
        out_shape=(jax.ShapeDtypeStruct((Bp, d_t), bf16),
                   jax.ShapeDtypeStruct((Bp, d_t), bf16)),
        grid=grid1,
        in_specs=[
            pl.BlockSpec((tile_b, img_dim), lambda i: (i, 0)),
            pl.BlockSpec((tile_b, txt_dim), lambda i: (i, 0)),
            # Weights: constant index_map -> DMA'd once, VMEM-resident.
            pl.BlockSpec(packed["W_i1"].shape, lambda i: (0, 0)),
            pl.BlockSpec(packed["W_t"].shape, lambda i: (0, 0)),
            pl.BlockSpec(packed["W1_t"].shape, lambda i: (0, 0)),
            pl.BlockSpec(packed["W2f"].shape, lambda i: (0, 0)),
            pl.BlockSpec(packed["W3f"].shape, lambda i: (0, 0)),
            pl.BlockSpec(packed["bias"].shape, lambda i: (0, 0)),
        ],
        out_specs=(
            pl.BlockSpec((tile_b, d_t), lambda i: (i, 0)),
            pl.BlockSpec((tile_b, d_t), lambda i: (i, 0)),
        ),
        compiler_params=pltpu.CompilerParams(
            dimension_semantics=("parallel",),
            vmem_limit_bytes=_vmem_limit(vmem1)),
        cost_estimate=pl.CostEstimate(
            flops=flops1, transcendentals=0, bytes_accessed=bytes1),
    )(i_f, t_f, *weights)

    # ----- stage 2: tiled logits = mlp_out @ t_e.T -----
    tile_i = 256 if Bp >= 256 else Bp
    tile_j = 256 if Bp >= 256 else Bp
    grid2 = (Bp // tile_i, Bp // tile_j)

    flops2 = 2 * Bp * Bp * d_t
    bytes2 = 2 * Bp * d_t * 2 + Bp * Bp * 4
    vmem2 = 2 * (tile_i + tile_j) * d_t * 2 + 2 * tile_i * tile_j * 4 + (1 << 20)

    logits = pl.pallas_call(
        logits_kernel,
        out_shape=jax.ShapeDtypeStruct((Bp, Bp), f32),
        grid=grid2,
        in_specs=[
            pl.BlockSpec((tile_i, d_t), lambda i, j: (i, 0)),
            pl.BlockSpec((tile_j, d_t), lambda i, j: (j, 0)),
        ],
        out_specs=pl.BlockSpec((tile_i, tile_j), lambda i, j: (i, j)),
        compiler_params=pltpu.CompilerParams(
            dimension_semantics=("parallel", "parallel"),
            vmem_limit_bytes=_vmem_limit(vmem2)),
        cost_estimate=pl.CostEstimate(
            flops=flops2, transcendentals=0, bytes_accessed=bytes2),
    )(mlp_out, t_e)

    if Bp != B:
        logits = logits[:B, :B]
    return logits


# ----------------------------------------------------------------------------
# Parameter init (matches the PyTorch module's shapes) + pure-JAX reference.
# ----------------------------------------------------------------------------
def init_params(key, image_output_dim, text_output_dim, text_feat_dim=768, hidden=512):
    ks = jax.random.split(key, 16)
    f32 = jnp.float32
    d_t = text_output_dim
    return {
        # CLIP projection matrices (nn.Parameter, std=0.2 init)
        "W_i": 0.2 * jax.random.normal(ks[0], (image_output_dim, d_t), f32),
        "W_t": 0.2 * jax.random.normal(ks[1], (text_feat_dim, d_t), f32),
        # mlp2 Linear(2*d_t, 512): weight split into the I_e half and T_e half
        "W1_i": 0.05 * jax.random.normal(ks[2], (d_t, hidden), f32),
        "W1_t": 0.05 * jax.random.normal(ks[3], (d_t, hidden), f32),
        "b1": jnp.zeros((1, hidden), f32),
        # BatchNorm1d(512) #1 (eval-mode running stats)
        "g1": 1.0 + 0.1 * jax.random.normal(ks[4], (1, hidden), f32),
        "beta1": 0.1 * jax.random.normal(ks[5], (1, hidden), f32),
        "m1": 0.1 * jax.random.normal(ks[6], (1, hidden), f32),
        "v1": 0.5 + jnp.abs(jax.random.normal(ks[7], (1, hidden), f32)),
        # mlp2 Linear(512, 512)
        "W2": 0.05 * jax.random.normal(ks[8], (hidden, hidden), f32),
        "b2": jnp.zeros((1, hidden), f32),
        # BatchNorm1d(512) #2
        "g2": 1.0 + 0.1 * jax.random.normal(ks[9], (1, hidden), f32),
        "beta2": 0.1 * jax.random.normal(ks[10], (1, hidden), f32),
        "m2": 0.1 * jax.random.normal(ks[11], (1, hidden), f32),
        "v2": 0.5 + jnp.abs(jax.random.normal(ks[12], (1, hidden), f32)),
        # mlp2 Linear(512, d_t)
        "W3": 0.05 * jax.random.normal(ks[13], (hidden, d_t), f32),
        "b3": jnp.zeros((1, d_t), f32),
    }


def reference_forward(i_f, t_f, p):
    """Pure-JAX f32 reference with the ORIGINAL (unfolded, unquantized) params —
    same eval-mode semantics as the PyTorch module."""
    i_e = i_f @ p["W_i"]
    t_e = t_f @ p["W_t"]
    combined = jnp.concatenate([i_e, t_e], axis=1)
    w1 = jnp.concatenate([p["W1_i"], p["W1_t"]], axis=0)
    h = jnp.maximum(combined @ w1 + p["b1"], 0.0)
    h = (h - p["m1"]) / jnp.sqrt(p["v1"] + BN_EPS) * p["g1"] + p["beta1"]
    h = jnp.maximum(h @ p["W2"] + p["b2"], 0.0)
    h = (h - p["m2"]) / jnp.sqrt(p["v2"] + BN_EPS) * p["g2"] + p["beta2"]
    out = h @ p["W3"] + p["b3"]
    return out @ t_e.T


if __name__ == "__main__":
    B = 8                    # batch of (image, text) pairs
    IMAGE_OUTPUT_DIM = 256   # ViT output dim
    TEXT_FEAT_DIM = 768      # BERT hidden size (fixed by the module)
    TEXT_OUTPUT_DIM = 128    # shared embedding dim

    key = jax.random.PRNGKey(0)
    k_if, k_tf, k_p = jax.random.split(key, 3)

    i_f32 = jax.random.normal(k_if, (B, IMAGE_OUTPUT_DIM), jnp.float32)  # ViT features
    t_f32 = jax.random.normal(k_tf, (B, TEXT_FEAT_DIM), jnp.float32)     # BERT CLS features

    params = init_params(k_p, IMAGE_OUTPUT_DIM, TEXT_OUTPUT_DIM, TEXT_FEAT_DIM)
    packed = pack_params(params)

    # In production the encoders' final op emits bf16 directly (no standalone
    # wrapper-side cast / extra HBM round-trip); modeled here on the synthetic
    # features so the kernel's input stream is bf16.
    i_f = i_f32.astype(jnp.bfloat16)
    t_f = t_f32.astype(jnp.bfloat16)

    logits = clip_next_forward(i_f, t_f, packed)
    logits = jax.block_until_ready(logits)

    ref = reference_forward(i_f32, t_f32, params)
    assert logits.shape == (B, B)
    # bf16 weights/features/intermediates feed f32-accumulated MXU matmuls;
    # compare with a normalized max-error tolerance against full-f32 semantics.
    norm_err = float(jnp.max(jnp.abs(logits - ref)) / (jnp.max(jnp.abs(ref)) + 1e-6))
    assert norm_err < 3e-2, f"mismatch vs JAX reference (normalized err={norm_err})"

    print("KERNEL_OK")
</pallas_src>

<mosaic_0001>
module attributes {stable_mosaic.version = 11 : i64} {
  func.func @clip_head_kernel(%arg0: i32, %arg1: memref<8x256xbf16, #tpu.memory_space<vmem>>, %arg2: memref<8x768xbf16, #tpu.memory_space<vmem>>, %arg3: memref<256x512xbf16, #tpu.memory_space<vmem>>, %arg4: memref<768x128xbf16, #tpu.memory_space<vmem>>, %arg5: memref<128x512xbf16, #tpu.memory_space<vmem>>, %arg6: memref<512x512xbf16, #tpu.memory_space<vmem>>, %arg7: memref<512x128xbf16, #tpu.memory_space<vmem>>, %arg8: memref<1x1152xf32, #tpu.memory_space<vmem>>, %arg9: memref<8x128xbf16, #tpu.memory_space<vmem>>, %arg10: memref<8x128xbf16, #tpu.memory_space<vmem>>) attributes {dimension_semantics = [#tpu.dimension_semantics<parallel>], iteration_bounds = array<i64: 1>, scalar_prefetch = 0 : i64, scratch_operands = 0 : i64, tpu.core_type = #tpu.core_type<tc>, window_params = [{transform_indices = @transform_0, window_bounds = array<i64: 8, 256>}, {transform_indices = @transform_1, window_bounds = array<i64: 8, 768>}, {pipeline_mode = #tpu.pipeline_mode<synchronous>, transform_indices = @transform_2, window_bounds = array<i64: 256, 512>}, {pipeline_mode = #tpu.pipeline_mode<synchronous>, transform_indices = @transform_3, window_bounds = array<i64: 768, 128>}, {pipeline_mode = #tpu.pipeline_mode<synchronous>, transform_indices = @transform_4, window_bounds = array<i64: 128, 512>}, {pipeline_mode = #tpu.pipeline_mode<synchronous>, transform_indices = @transform_5, window_bounds = array<i64: 512, 512>}, {pipeline_mode = #tpu.pipeline_mode<synchronous>, transform_indices = @transform_6, window_bounds = array<i64: 512, 128>}, {pipeline_mode = #tpu.pipeline_mode<synchronous>, transform_indices = @transform_7, window_bounds = array<i64: 1, 1152>}, {transform_indices = @transform_8, window_bounds = array<i64: 8, 128>}, {transform_indices = @transform_9, window_bounds = array<i64: 8, 128>}]} {
    %c0 = arith.constant 0 : index
    %c0_0 = arith.constant 0 : index
    %0 = vector.load %arg1[%c0, %c0_0] : memref<8x256xbf16, #tpu.memory_space<vmem>>, vector<8x256xbf16>
    %c0_1 = arith.constant 0 : index
    %c0_2 = arith.constant 0 : index
    %1 = vector.load %arg2[%c0_1, %c0_2] : memref<8x768xbf16, #tpu.memory_space<vmem>>, vector<8x768xbf16>
    %c0_3 = arith.constant 0 : index
    %c0_4 = arith.constant 0 : index
    %2 = vector.load %arg8[%c0_3, %c0_4] : memref<1x1152xf32, #tpu.memory_space<vmem>>, vector<1x512xf32>
    %c0_5 = arith.constant 0 : index
    %c512 = arith.constant 512 : index
    %3 = vector.load %arg8[%c0_5, %c512] : memref<1x1152xf32, #tpu.memory_space<vmem>>, vector<1x512xf32>
    %c0_6 = arith.constant 0 : index
    %c1024 = arith.constant 1024 : index
    %4 = vector.load %arg8[%c0_6, %c1024] : memref<1x1152xf32, #tpu.memory_space<vmem>>, vector<1x128xf32>
    %c0_7 = arith.constant 0 : index
    %c0_8 = arith.constant 0 : index
    %5 = vector.load %arg4[%c0_7, %c0_8] : memref<768x128xbf16, #tpu.memory_space<vmem>>, vector<768x128xbf16>
    %cst = arith.constant dense<0.000000e+00> : vector<8x128xf32>
    %6 = tpu.matmul %1, %5, %cst {dimension_numbers = #tpu.dot_dimension_numbers<[1], [0], [0], [1], [0, 0, 1, 1], [], []>} : vector<8x768xbf16>, vector<768x128xbf16>, vector<8x128xf32> -> vector<8x128xf32>
    %c0_9 = arith.constant 0 : index
    %c0_10 = arith.constant 0 : index
    %7 = vector.load %arg3[%c0_9, %c0_10] : memref<256x512xbf16, #tpu.memory_space<vmem>>, vector<256x512xbf16>
    %cst_11 = arith.constant dense<0.000000e+00> : vector<8x512xf32>
    %8 = tpu.matmul %0, %7, %cst_11 {dimension_numbers = #tpu.dot_dimension_numbers<[1], [0], [0], [1], [0, 0, 1, 1], [], []>} : vector<8x256xbf16>, vector<256x512xbf16>, vector<8x512xf32> -> vector<8x512xf32>
    %9 = arith.truncf %6 : vector<8x128xf32> to vector<8x128xbf16>
    %c0_12 = arith.constant 0 : index
    %c0_13 = arith.constant 0 : index
    %10 = vector.load %arg5[%c0_12, %c0_13] : memref<128x512xbf16, #tpu.memory_space<vmem>>, vector<128x512xbf16>
    %cst_14 = arith.constant dense<0.000000e+00> : vector<8x512xf32>
    %11 = tpu.matmul %9, %10, %cst_14 {dimension_numbers = #tpu.dot_dimension_numbers<[1], [0], [0], [1], [0, 0, 1, 1], [], []>} : vector<8x128xbf16>, vector<128x512xbf16>, vector<8x512xf32> -> vector<8x512xf32>
    %12 = arith.addf %8, %11 : vector<8x512xf32>
    %13 = vector.broadcast %2 : vector<1x512xf32> to vector<8x512xf32>
    %14 = arith.addf %12, %13 : vector<8x512xf32>
    %cst_15 = arith.constant 0.000000e+00 : f32
    %15 = vector.broadcast %cst_15 : f32 to vector<8x512xf32>
    %16 = arith.maximumf %14, %15 : vector<8x512xf32>
    %17 = arith.truncf %16 : vector<8x512xf32> to vector<8x512xbf16>
    %c0_16 = arith.constant 0 : index
    %c0_17 = arith.constant 0 : index
    %18 = vector.load %arg6[%c0_16, %c0_17] : memref<512x512xbf16, #tpu.memory_space<vmem>>, vector<512x512xbf16>
    %cst_18 = arith.constant dense<0.000000e+00> : vector<8x512xf32>
    %19 = tpu.matmul %17, %18, %cst_18 {dimension_numbers = #tpu.dot_dimension_numbers<[1], [0], [0], [1], [0, 0, 1, 1], [], []>} : vector<8x512xbf16>, vector<512x512xbf16>, vector<8x512xf32> -> vector<8x512xf32>
    %20 = vector.broadcast %3 : vector<1x512xf32> to vector<8x512xf32>
    %21 = arith.addf %19, %20 : vector<8x512xf32>
    %cst_19 = arith.constant 0.000000e+00 : f32
    %22 = vector.broadcast %cst_19 : f32 to vector<8x512xf32>
    %23 = arith.maximumf %21, %22 : vector<8x512xf32>
    %24 = arith.truncf %23 : vector<8x512xf32> to vector<8x512xbf16>
    %c0_20 = arith.constant 0 : index
    %c0_21 = arith.constant 0 : index
    %25 = vector.load %arg7[%c0_20, %c0_21] : memref<512x128xbf16, #tpu.memory_space<vmem>>, vector<512x128xbf16>
    %cst_22 = arith.constant dense<0.000000e+00> : vector<8x128xf32>
    %26 = tpu.matmul %24, %25, %cst_22 {dimension_numbers = #tpu.dot_dimension_numbers<[1], [0], [0], [1], [0, 0, 1, 1], [], []>} : vector<8x512xbf16>, vector<512x128xbf16>, vector<8x128xf32> -> vector<8x128xf32>
    %27 = vector.broadcast %4 : vector<1x128xf32> to vector<8x128xf32>
    %28 = arith.addf %26, %27 : vector<8x128xf32>
    %29 = arith.truncf %28 : vector<8x128xf32> to vector<8x128xbf16>
    %c0_23 = arith.constant 0 : index
    %c0_24 = arith.constant 0 : index
    %30 = vector.load %arg9[%c0_23, %c0_24] : memref<8x128xbf16, #tpu.memory_space<vmem>>, vector<8x128xbf16>
    tpu.vector_store %arg9[%c0_23, %c0_24], %29 {strides = array<i32>} : memref<8x128xbf16, #tpu.memory_space<vmem>>, vector<8x128xbf16>,
    %31 = arith.truncf %6 : vector<8x128xf32> to vector<8x128xbf16>
    %c0_25 = arith.constant 0 : index
    %c0_26 = arith.constant 0 : index
    %32 = vector.load %arg10[%c0_25, %c0_26] : memref<8x128xbf16, #tpu.memory_space<vmem>>, vector<8x128xbf16>
    tpu.vector_store %arg10[%c0_25, %c0_26], %31 {strides = array<i32>} : memref<8x128xbf16, #tpu.memory_space<vmem>>, vector<8x128xbf16>,
    return
  }
  func.func @transform_0(%arg0: i32) -> (i32, i32) {
    %c0_i32 = arith.constant 0 : i32
    %c0_i32_0 = arith.constant 0 : i32
    return %arg0, %c0_i32 : i32, i32
  }
  func.func @transform_1(%arg0: i32) -> (i32, i32) {
    %c0_i32 = arith.constant 0 : i32
    %c0_i32_0 = arith.constant 0 : i32
    return %arg0, %c0_i32 : i32, i32
  }
  func.func @transform_2(%arg0: i32) -> (i32, i32) {
    %c0_i32 = arith.constant 0 : i32
    %c0_i32_0 = arith.constant 0 : i32
    %c0_i32_1 = arith.constant 0 : i32
    return %c0_i32, %c0_i32_0 : i32, i32
  }
  func.func @transform_3(%arg0: i32) -> (i32, i32) {
    %c0_i32 = arith.constant 0 : i32
    %c0_i32_0 = arith.constant 0 : i32
    %c0_i32_1 = arith.constant 0 : i32
    return %c0_i32, %c0_i32_0 : i32, i32
  }
  func.func @transform_4(%arg0: i32) -> (i32, i32) {
    %c0_i32 = arith.constant 0 : i32
    %c0_i32_0 = arith.constant 0 : i32
    %c0_i32_1 = arith.constant 0 : i32
    return %c0_i32, %c0_i32_0 : i32, i32
  }
  func.func @transform_5(%arg0: i32) -> (i32, i32) {
    %c0_i32 = arith.constant 0 : i32
    %c0_i32_0 = arith.constant 0 : i32
    %c0_i32_1 = arith.constant 0 : i32
    return %c0_i32, %c0_i32_0 : i32, i32
  }
  func.func @transform_6(%arg0: i32) -> (i32, i32) {
    %c0_i32 = arith.constant 0 : i32
    %c0_i32_0 = arith.constant 0 : i32
    %c0_i32_1 = arith.constant 0 : i32
    return %c0_i32, %c0_i32_0 : i32, i32
  }
  func.func @transform_7(%arg0: i32) -> (i32, i32) {
    %c0_i32 = arith.constant 0 : i32
    %c0_i32_0 = arith.constant 0 : i32
    %c0_i32_1 = arith.constant 0 : i32
    return %c0_i32, %c0_i32_0 : i32, i32
  }
  func.func @transform_8(%arg0: i32) -> (i32, i32) {
    %c0_i32 = arith.constant 0 : i32
    %c0_i32_0 = arith.constant 0 : i32
    return %arg0, %c0_i32 : i32, i32
  }
  func.func @transform_9(%arg0: i32) -> (i32, i32) {
    %c0_i32 = arith.constant 0 : i32
    %c0_i32_0 = arith.constant 0 : i32
    return %arg0, %c0_i32 : i32, i32
  }
}

</mosaic_0001>

<llo_original>
// kernel: tpu_custom_call.1
$region0: #{tpu_custom_call.1}
  #allocation0 [shape = 'u32[]', space=smem, size = 0x4, offset = 0x4, fixed_abs, tag = 'smem constant byte address 0x4 - core index']
  #allocation1 [shape = 'u32[144,128]{1,0:T(1,128)}', space=vmem, size = 0x12000, scoped, tag = 'internal scratch']
  %s0 = inlined_call_operand.hbm [shape: bf16[8,256], index: 0, kind: input, shape index: {}]
  %s1 = inlined_call_operand.hbm [shape: bf16[8,768], index: 1, kind: input, shape index: {}]
  %s2 = inlined_call_operand.hbm [shape: bf16[256,512], index: 2, kind: input, shape index: {}]
  %s3 = inlined_call_operand.hbm [shape: bf16[768,128], index: 3, kind: input, shape index: {}]
  %s4 = inlined_call_operand.hbm [shape: bf16[128,512], index: 4, kind: input, shape index: {}]
  %s5 = inlined_call_operand.hbm [shape: bf16[512,512], index: 5, kind: input, shape index: {}]
  %s6 = inlined_call_operand.hbm [shape: bf16[512,128], index: 6, kind: input, shape index: {}]
  %s7 = inlined_call_operand.vmem [shape: f32[1,1152], index: 7, kind: input, shape index: {}]
  %s8 = inlined_call_operand.hbm [shape: bf16[8,128], index: 8, kind: output, shape index: {0}]
  %s9 = inlined_call_operand.hbm [shape: bf16[8,128], index: 9, kind: output, shape index: {1}]
  %10 = xla_tuple %s8, %s9
  %s11 = sld [smem:[#allocation0]]
  $region78: #{tpu_custom_call.1} parent=0
    _
  %s13 = ssub.s32 1, %s11
  %s14 = scalar_select 0, %s13, %s11
  $region1: #{tpu_custom_call.1} parent=0
    #allocation2 [shape = 'u8[4096]{0}', space=vmem, size = 0x1000, scoped, tag = 'input window, operand 0, single buffered']
    #allocation3 [shape = 's32[1]{0}', space=sflag, size = 0x4, scoped, tag = 'scoped memory for tpu_custom_call.1']
    #allocation4 [shape = 's32[1]{0}', space=sflag, size = 0x4, scoped, tag = 'scoped memory for tpu_custom_call.1']
    #allocation5 [shape = 'u8[12288]{0}', space=vmem, size = 0x3000, scoped, tag = 'input window, operand 1, single buffered']
    #allocation6 [shape = 's32[1]{0}', space=sflag, size = 0x4, scoped, tag = 'scoped memory for tpu_custom_call.1']
    #allocation7 [shape = 'u8[262144]{0}', space=vmem, size = 0x40000, scoped, tag = 'input window, operand 2, single buffered']
    #allocation8 [shape = 'u8[196608]{0}', space=vmem, size = 0x30000, scoped, tag = 'input window, operand 3, single buffered']
    #allocation9 [shape = 's32[1]{0}', space=sflag, size = 0x4, scoped, tag = 'scoped memory for tpu_custom_call.1']
    #allocation10 [shape = 'u8[131072]{0}', space=vmem, size = 0x20000, scoped, tag = 'input window, operand 4, single buffered']
    #allocation11 [shape = 'u8[524288]{0}', space=vmem, size = 0x80000, scoped, tag = 'input window, operand 5, single buffered']
    #allocation12 [shape = 's32[1]{0}', space=sflag, size = 0x4, scoped, tag = 'scoped memory for tpu_custom_call.1']
    #allocation13 [shape = 'u8[131072]{0}', space=vmem, size = 0x20000, scoped, tag = 'input window, operand 6, single buffered']
    #allocation14 [shape = 'u8[2048]{0}', space=vmem, size = 0x800, scoped, tag = 'output window, operand 0, single buffered']
    #allocation15 [shape = 'u8[2048]{0}', space=vmem, size = 0x800, scoped, tag = 'output window, operand 1, single buffered']
    #allocation16 [shape = 's32[1]{0}', space=sflag, size = 0x4, scoped, tag = 'scoped memory for tpu_custom_call.1']
    %15 = vsyncpa [#allocation3], 0
    %16 = vsyncpa [#allocation6], 0
    %17 = vsyncpa [#allocation9], 0
    %18 = vsyncpa [#allocation12], 0
    %19 = vsyncpa [#allocation4], 0
    %20 = vsyncpa [#allocation16], 0
    // Predicated region
    $region2: #{tpu_custom_call.1} parent=1 // pred_check
      _
    $region3: #{tpu_custom_call.1} parent=1 // pred_check_branch
      %22 = sbr.rel (0) target = $region5
    $region4: #{tpu_custom_call.1} parent=1 // pred_region
      %s24 = ssub.s32 128, 128
      %25 = vsyncadd [#allocation3], %s24
      %s27 = sshll.u32 [#allocation2], 4
      %s28 = int_to_ptr.vmem [resolvable:$true] %s27
      %30 = dma.hbm_to_vmem [thread:$0]  %s0, 128, %s28, [#allocation3]
    $region5: #{tpu_custom_call.1} parent=1 // pred_fallthru
      _
    // Predicated region
    $region6: #{tpu_custom_call.1} parent=1 // pred_check
      _
    $region7: #{tpu_custom_call.1} parent=1 // pred_check_branch
      %32 = sbr.rel (0) target = $region9
    $region8: #{tpu_custom_call.1} parent=1 // pred_region
      %s34 = ssub.s32 384, 384
      %35 = vsyncadd [#allocation6], %s34
      %s37 = sshll.u32 [#allocation5], 4
      %s38 = int_to_ptr.vmem [resolvable:$true] %s37
      %40 = dma.hbm_to_vmem [thread:$0]  %s1, 384, %s38, [#allocation6]
    $region9: #{tpu_custom_call.1} parent=1 // pred_fallthru
      _
    // Predicated region
    $region10: #{tpu_custom_call.1} parent=1 // pred_check
      _
    $region11: #{tpu_custom_call.1} parent=1 // pred_check_branch
      %42 = sbr.rel (0) target = $region13
    $region12: #{tpu_custom_call.1} parent=1 // pred_region
      %s44 = ssub.s32 8192, 8192
      %45 = vsyncadd [#allocation6], %s44
      %s46 = sshll.u32 [#allocation7], 4
      %s47 = int_to_ptr.vmem [resolvable:$true] %s46
      %52 = dma.hbm_to_vmem [thread:$0]  %s2, 8192, %s47, [#allocation6], 256, 256, 16
    $region13: #{tpu_custom_call.1} parent=1 // pred_fallthru
      _
    // Predicated region
    $region14: #{tpu_custom_call.1} parent=1 // pred_check
      _
    $region15: #{tpu_custom_call.1} parent=1 // pred_check_branch
      %54 = sbr.rel (0) target = $region17
    $region16: #{tpu_custom_call.1} parent=1 // pred_region
      %s56 = ssub.s32 6144, 6144
      %57 = vsyncadd [#allocation9], %s56
      %s58 = sshll.u32 [#allocation8], 4
      %s59 = int_to_ptr.vmem [resolvable:$true] %s58
      %64 = dma.hbm_to_vmem [thread:$0]  %s3, 6144, %s59, [#allocation9], 64, 64, 4
    $region17: #{tpu_custom_call.1} parent=1 // pred_fallthru
      _
    // Predicated region
    $region18: #{tpu_custom_call.1} parent=1 // pred_check
      _
    $region19: #{tpu_custom_call.1} parent=1 // pred_check_branch
      %66 = sbr.rel (0) target = $region21
    $region20: #{tpu_custom_call.1} parent=1 // pred_region
      %s68 = ssub.s32 4096, 4096
      %69 = vsyncadd [#allocation9], %s68
      %s70 = sshll.u32 [#allocation10], 4
      %s71 = int_to_ptr.vmem [resolvable:$true] %s70
      %76 = dma.hbm_to_vmem [thread:$0]  %s4, 4096, %s71, [#allocation9], 256, 256, 16
    $region21: #{tpu_custom_call.1} parent=1 // pred_fallthru
      _
    // Predicated region
    $region22: #{tpu_custom_call.1} parent=1 // pred_check
      _
    $region23: #{tpu_custom_call.1} parent=1 // pred_check_branch
      %78 = sbr.rel (0) target = $region25
    $region24: #{tpu_custom_call.1} parent=1 // pred_region
      %s80 = ssub.s32 16384, 16384
      %81 = vsyncadd [#allocation12], %s80
      %s82 = sshll.u32 [#allocation11], 4
      %s83 = int_to_ptr.vmem [resolvable:$true] %s82
      %88 = dma.hbm_to_vmem [thread:$0]  %s5, 16384, %s83, [#allocation12], 256, 256, 16
    $region25: #{tpu_custom_call.1} parent=1 // pred_fallthru
      _
    // Predicated region
    $region26: #{tpu_custom_call.1} parent=1 // pred_check
      _
    $region27: #{tpu_custom_call.1} parent=1 // pred_check_branch
      %90 = sbr.rel (0) target = $region29
    $region28: #{tpu_custom_call.1} parent=1 // pred_region
      %s92 = ssub.s32 4096, 4096
      %93 = vsyncadd [#allocation12], %s92
      %s94 = sshll.u32 [#allocation13], 4
      %s95 = int_to_ptr.vmem [resolvable:$true] %s94
      %100 = dma.hbm_to_vmem [thread:$0]  %s6, 4096, %s95, [#allocation12], 64, 64, 4
    $region29: #{tpu_custom_call.1} parent=1 // pred_fallthru
      _
    // Predicated region
    $region30: #{tpu_custom_call.1} parent=1 // pred_check
      _
    $region31: #{tpu_custom_call.1} parent=1 // pred_check_branch
      %102 = sbr.rel (0) target = $region33
    $region32: #{tpu_custom_call.1} parent=1 // pred_region
      _
    $region33: #{tpu_custom_call.1} parent=1 // pred_fallthru
      _
    // Predicated region
    $region34: #{tpu_custom_call.1} parent=1 // pred_check
      _
    $region35: #{tpu_custom_call.1} parent=1 // pred_check_branch
      %104 = sbr.rel (0) target = $region37
    $region36: #{tpu_custom_call.1} parent=1 // pred_region
      %105 = dma.done [#allocation3], 128
    $region37: #{tpu_custom_call.1} parent=1 // pred_fallthru
      _
    // Predicated region
    $region38: #{tpu_custom_call.1} parent=1 // pred_check
      _
    $region39: #{tpu_custom_call.1} parent=1 // pred_check_branch
      %107 = sbr.rel (0) target = $region41
    $region40: #{tpu_custom_call.1} parent=1 // pred_region
      %108 = dma.done [#allocation6], 384
    $region41: #{tpu_custom_call.1} parent=1 // pred_fallthru
      _
    // Predicated region
    $region42: #{tpu_custom_call.1} parent=1 // pred_check
      _
    $region43: #{tpu_custom_call.1} parent=1 // pred_check_branch
      %110 = sbr.rel (0) target = $region45
    $region44: #{tpu_custom_call.1} parent=1 // pred_region
      %111 = dma.done [#allocation6], 8192
    $region45: #{tpu_custom_call.1} parent=1 // pred_fallthru
      _
    // Predicated region
    $region46: #{tpu_custom_call.1} parent=1 // pred_check
      _
    $region47: #{tpu_custom_call.1} parent=1 // pred_check_branch
      %113 = sbr.rel (0) target = $region49
    $region48: #{tpu_custom_call.1} parent=1 // pred_region
      %114 = dma.done [#allocation9], 6144
    $region49: #{tpu_custom_call.1} parent=1 // pred_fallthru
      _
    // Predicated region
    $region50: #{tpu_custom_call.1} parent=1 // pred_check
      _
    $region51: #{tpu_custom_call.1} parent=1 // pred_check_branch
      %116 = sbr.rel (0) target = $region53
    $region52: #{tpu_custom_call.1} parent=1 // pred_region
      %117 = dma.done [#allocation9], 4096
    $region53: #{tpu_custom_call.1} parent=1 // pred_fallthru
      _
    // Predicated region
    $region54: #{tpu_custom_call.1} parent=1 // pred_check
      _
    $region55: #{tpu_custom_call.1} parent=1 // pred_check_branch
      %119 = sbr.rel (0) target = $region57
    $region56: #{tpu_custom_call.1} parent=1 // pred_region
      %120 = dma.done [#allocation12], 16384
    $region57: #{tpu_custom_call.1} parent=1 // pred_fallthru
      _
    // Predicated region
    $region58: #{tpu_custom_call.1} parent=1 // pred_check
      _
    $region59: #{tpu_custom_call.1} parent=1 // pred_check_branch
      %122 = sbr.rel (0) target = $region61
    $region60: #{tpu_custom_call.1} parent=1 // pred_region
      %123 = dma.done [#allocation12], 4096
    $region61: #{tpu_custom_call.1} parent=1 // pred_fallthru
      _
    %v125 = vld [vmem:[#allocation2] sm:$0xff]
    %v126 = vld [vmem:[#allocation5] sm:$0xff]
    %v127 = vld [vmem:[#allocation5 + $0x8] sm:$0xff]
    %v128 = vld [vmem:[#allocation5 + $0x10] sm:$0xff]
    %v129 = vld [vmem:[%s7] sm:$0xf]
    %v130 = vld [vmem:[%s7 + $0x4] sm:$0xf]
    %v131 = vld [vmem:[%s7 + $0x8] sm:$0x1]
    %v132 = vld [vmem:[#allocation8] sm:$0xf]
    %v133 = vld [vmem:[#allocation8 + $0x4] sm:$0xf]
    %v134 = vld [vmem:[#allocation8 + $0x8] sm:$0xf]
    %v135 = vld [vmem:[#allocation8 + $0xc] sm:$0xf]
    %v136 = vld [vmem:[#allocation8 + $0x10] sm:$0xf]
    %v137 = vld [vmem:[#allocation8 + $0x14] sm:$0xf]
    %v138 = vld [vmem:[#allocation8 + $0x18] sm:$0xf]
    %v139 = vld [vmem:[#allocation8 + $0x1c] sm:$0xf]
    %v140 = vld [vmem:[#allocation8 + $0x20] sm:$0xf]
    %v141 = vld [vmem:[#allocation8 + $0x24] sm:$0xf]
    %v142 = vld [vmem:[#allocation8 + $0x28] sm:$0xf]
    %v143 = vld [vmem:[#allocation8 + $0x2c] sm:$0xf]
    %v144 = vld [vmem:[#allocation8 + $0x30] sm:$0xf]
    %v145 = vld [vmem:[#allocation8 + $0x34] sm:$0xf]
    %v146 = vld [vmem:[#allocation8 + $0x38] sm:$0xf]
    %v147 = vld [vmem:[#allocation8 + $0x3c] sm:$0xf]
    %v148 = vld [vmem:[#allocation8 + $0x40] sm:$0xf]
    %v149 = vld [vmem:[#allocation8 + $0x44] sm:$0xf]
    %v150 = vld [vmem:[#allocation8 + $0x48] sm:$0xf]
    %v151 = vld [vmem:[#allocation8 + $0x4c] sm:$0xf]
    %v152 = vld [vmem:[#allocation8 + $0x50] sm:$0xf]
    %v153 = vld [vmem:[#allocation8 + $0x54] sm:$0xf]
    %v154 = vld [vmem:[#allocation8 + $0x58] sm:$0xf]
    %v155 = vld [vmem:[#allocation8 + $0x5c] sm:$0xf]
    %v156 = vld [vmem:[#allocation8 + $0x60] sm:$0xf]
    %v157 = vld [vmem:[#allocation8 + $0x64] sm:$0xf]
    %v158 = vld [vmem:[#allocation8 + $0x68] sm:$0xf]
    %v159 = vld [vmem:[#allocation8 + $0x6c] sm:$0xf]
    %v160 = vld [vmem:[#allocation8 + $0x70] sm:$0xf]
    %v161 = vld [vmem:[#allocation8 + $0x74] sm:$0xf]
    %v162 = vld [vmem:[#allocation8 + $0x78] sm:$0xf]
    %v163 = vld [vmem:[#allocation8 + $0x7c] sm:$0xf]
    %v164 = vld [vmem:[#allocation8 + $0x80] sm:$0xf]
    %v165 = vld [vmem:[#allocation8 + $0x84] sm:$0xf]
    %v166 = vld [vmem:[#allocation8 + $0x88] sm:$0xf]
    %v167 = vld [vmem:[#allocation8 + $0x8c] sm:$0xf]
    %v168 = vld [vmem:[#allocation8 + $0x90] sm:$0xf]
    %v169 = vld [vmem:[#allocation8 + $0x94] sm:$0xf]
    %v170 = vld [vmem:[#allocation8 + $0x98] sm:$0xf]
    %v171 = vld [vmem:[#allocation8 + $0x9c] sm:$0xf]
    %v172 = vld [vmem:[#allocation8 + $0xa0] sm:$0xf]
    %v173 = vld [vmem:[#allocation8 + $0xa4] sm:$0xf]
    %v174 = vld [vmem:[#allocation8 + $0xa8] sm:$0xf]
    %v175 = vld [vmem:[#allocation8 + $0xac] sm:$0xf]
    %v176 = vld [vmem:[#allocation8 + $0xb0] sm:$0xf]
    %v177 = vld [vmem:[#allocation8 + $0xb4] sm:$0xf]
    %v178 = vld [vmem:[#allocation8 + $0xb8] sm:$0xf]
    %v179 = vld [vmem:[#allocation8 + $0xbc] sm:$0xf]
    %v180 = vld [vmem:[#allocation8 + $0xc0] sm:$0xf]
    %v181 = vld [vmem:[#allocation8 + $0xc4] sm:$0xf]
    %v182 = vld [vmem:[#allocation8 + $0xc8] sm:$0xf]
    %v183 = vld [vmem:[#allocation8 + $0xcc] sm:$0xf]
    %v184 = vld [vmem:[#allocation8 + $0xd0] sm:$0xf]
    %v185 = vld [vmem:[#allocation8 + $0xd4] sm:$0xf]
    %v186 = vld [vmem:[#allocation8 + $0xd8] sm:$0xf]
    %v187 = vld [vmem:[#allocation8 + $0xdc] sm:$0xf]
    %v188 = vld [vmem:[#allocation8 + $0xe0] sm:$0xf]
    %v189 = vld [vmem:[#allocation8 + $0xe4] sm:$0xf]
    %v190 = vld [vmem:[#allocation8 + $0xe8] sm:$0xf]
    %v191 = vld [vmem:[#allocation8 + $0xec] sm:$0xf]
    %v192 = vld [vmem:[#allocation8 + $0xf0] sm:$0xf]
    %v193 = vld [vmem:[#allocation8 + $0xf4] sm:$0xf]
    %v194 = vld [vmem:[#allocation8 + $0xf8] sm:$0xf]
    %v195 = vld [vmem:[#allocation8 + $0xfc] sm:$0xf]
    %v196 = vld [vmem:[#allocation8 + $0x100] sm:$0xf]
    %v197 = vld [vmem:[#allocation8 + $0x104] sm:$0xf]
    %v198 = vld [vmem:[#allocation8 + $0x108] sm:$0xf]
    %v199 = vld [vmem:[#allocation8 + $0x10c] sm:$0xf]
    %v200 = vld [vmem:[#allocation8 + $0x110] sm:$0xf]
    %v201 = vld [vmem:[#allocation8 + $0x114] sm:$0xf]
    %v202 = vld [vmem:[#allocation8 + $0x118] sm:$0xf]
    %v203 = vld [vmem:[#allocation8 + $0x11c] sm:$0xf]
    %v204 = vld [vmem:[#allocation8 + $0x120] sm:$0xf]
    %v205 = vld [vmem:[#allocation8 + $0x124] sm:$0xf]
    %v206 = vld [vmem:[#allocation8 + $0x128] sm:$0xf]
    %v207 = vld [vmem:[#allocation8 + $0x12c] sm:$0xf]
    %v208 = vld [vmem:[#allocation8 + $0x130] sm:$0xf]
    %v209 = vld [vmem:[#allocation8 + $0x134] sm:$0xf]
    %v210 = vld [vmem:[#allocation8 + $0x138] sm:$0xf]
    %v211 = vld [vmem:[#allocation8 + $0x13c] sm:$0xf]
    %v212 = vld [vmem:[#allocation8 + $0x140] sm:$0xf]
    %v213 = vld [vmem:[#allocation8 + $0x144] sm:$0xf]
    %v214 = vld [vmem:[#allocation8 + $0x148] sm:$0xf]
    %v215 = vld [vmem:[#allocation8 + $0x14c] sm:$0xf]
    %v216 = vld [vmem:[#allocation8 + $0x150] sm:$0xf]
    %v217 = vld [vmem:[#allocation8 + $0x154] sm:$0xf]
    %v218 = vld [vmem:[#allocation8 + $0x158] sm:$0xf]
    %v219 = vld [vmem:[#allocation8 + $0x15c] sm:$0xf]
    %v220 = vld [vmem:[#allocation8 + $0x160] sm:$0xf]
    %v221 = vld [vmem:[#allocation8 + $0x164] sm:$0xf]
    %v222 = vld [vmem:[#allocation8 + $0x168] sm:$0xf]
    %v223 = vld [vmem:[#allocation8 + $0x16c] sm:$0xf]
    %v224 = vld [vmem:[#allocation8 + $0x170] sm:$0xf]
    %v225 = vld [vmem:[#allocation8 + $0x174] sm:$0xf]
    %v226 = vld [vmem:[#allocation8 + $0x178] sm:$0xf]
    %v227 = vld [vmem:[#allocation8 + $0x17c] sm:$0xf]
    %v231 = vunpack.c.l.b16 %v126
    %v232 = vunpack.c.h.b16 %v126
    %v233 = vunpack.c.l.b16 %v127
    %v234 = vunpack.c.h.b16 %v127
    %v235 = vunpack.c.l.b16 %v128
    %v236 = vunpack.c.h.b16 %v128
    %v237 = vpack.c.b16 %v231, %v231
    %v238 = vpack.c.b16 %v232, %v232
    %v239 = vpack.c.b16 %v233, %v233
    %v240 = vpack.c.b16 %v234, %v234
    %v241 = vpack.c.b16 %v235, %v235
    %v242 = vpack.c.b16 %v236, %v236
    %v345 = vunpack.c.l.b16 %v132
    %v346 = vunpack.c.l.b16 %v133
    %v347 = vunpack.c.l.b16 %v134
    %v348 = vunpack.c.l.b16 %v135
    %v349 = vunpack.c.l.b16 %v136
    %v350 = vunpack.c.l.b16 %v137
    %v351 = vunpack.c.l.b16 %v138
    %v352 = vunpack.c.l.b16 %v139
    %v353 = vunpack.c.l.b16 %v140
    %v354 = vunpack.c.l.b16 %v141
    %v355 = vunpack.c.l.b16 %v142
    %v356 = vunpack.c.l.b16 %v143
    %v357 = vunpack.c.l.b16 %v144
    %v358 = vunpack.c.l.b16 %v145
    %v359 = vunpack.c.l.b16 %v146
    %v360 = vunpack.c.l.b16 %v147
    %v361 = vunpack.c.l.b16 %v148
    %v362 = vunpack.c.l.b16 %v149
    %v363 = vunpack.c.l.b16 %v150
    %v364 = vunpack.c.l.b16 %v151
    %v365 = vunpack.c.l.b16 %v152
    %v366 = vunpack.c.l.b16 %v153
    %v367 = vunpack.c.l.b16 %v154
    %v368 = vunpack.c.l.b16 %v155
    %v369 = vunpack.c.l.b16 %v156
    %v370 = vunpack.c.l.b16 %v157
    %v371 = vunpack.c.l.b16 %v158
    %v372 = vunpack.c.l.b16 %v159
    %v373 = vunpack.c.l.b16 %v160
    %v374 = vunpack.c.l.b16 %v161
    %v375 = vunpack.c.l.b16 %v162
    %v376 = vunpack.c.l.b16 %v163
    %v377 = vunpack.c.l.b16 %v164
    %v378 = vunpack.c.l.b16 %v165
    %v379 = vunpack.c.l.b16 %v166
    %v380 = vunpack.c.l.b16 %v167
    %v381 = vunpack.c.l.b16 %v168
    %v382 = vunpack.c.l.b16 %v169
    %v383 = vunpack.c.l.b16 %v170
    %v384 = vunpack.c.l.b16 %v171
    %v385 = vunpack.c.l.b16 %v172
    %v386 = vunpack.c.l.b16 %v173
    %v387 = vunpack.c.l.b16 %v174
    %v388 = vunpack.c.l.b16 %v175
    %v389 = vunpack.c.l.b16 %v176
    %v390 = vunpack.c.l.b16 %v177
    %v391 = vunpack.c.l.b16 %v178
    %v392 = vunpack.c.l.b16 %v179
    %v393 = vunpack.c.l.b16 %v180
    %v394 = vunpack.c.l.b16 %v181
    %v395 = vunpack.c.l.b16 %v182
    %v396 = vunpack.c.l.b16 %v183
    %v397 = vunpack.c.l.b16 %v184
    %v398 = vunpack.c.l.b16 %v185
    %v399 = vunpack.c.l.b16 %v186
    %v400 = vunpack.c.l.b16 %v187
    %v401 = vunpack.c.l.b16 %v188
    %v402 = vunpack.c.l.b16 %v189
    %v403 = vunpack.c.l.b16 %v190
    %v404 = vunpack.c.l.b16 %v191
    %v405 = vunpack.c.l.b16 %v192
    %v406 = vunpack.c.l.b16 %v193
    %v407 = vunpack.c.l.b16 %v194
    %v408 = vunpack.c.l.b16 %v195
    %v409 = vunpack.c.l.b16 %v196
    %v410 = vunpack.c.l.b16 %v197
    %v411 = vunpack.c.l.b16 %v198
    %v412 = vunpack.c.l.b16 %v199
    %v413 = vunpack.c.l.b16 %v200
    %v414 = vunpack.c.l.b16 %v201
    %v415 = vunpack.c.l.b16 %v202
    %v416 = vunpack.c.l.b16 %v203
    %v417 = vunpack.c.l.b16 %v204
    %v418 = vunpack.c.l.b16 %v205
    %v419 = vunpack.c.l.b16 %v206
    %v420 = vunpack.c.l.b16 %v207
    %v421 = vunpack.c.l.b16 %v208
    %v422 = vunpack.c.l.b16 %v209
    %v423 = vunpack.c.l.b16 %v210
    %v424 = vunpack.c.l.b16 %v211
    %v425 = vunpack.c.l.b16 %v212
    %v426 = vunpack.c.l.b16 %v213
    %v427 = vunpack.c.l.b16 %v214
    %v428 = vunpack.c.l.b16 %v215
    %v429 = vunpack.c.l.b16 %v216
    %v430 = vunpack.c.l.b16 %v217
    %v431 = vunpack.c.l.b16 %v218
    %v432 = vunpack.c.l.b16 %v219
    %v433 = vunpack.c.l.b16 %v220
    %v434 = vunpack.c.l.b16 %v221
    %v435 = vunpack.c.l.b16 %v222
    %v436 = vunpack.c.l.b16 %v223
    %v437 = vunpack.c.l.b16 %v224
    %v438 = vunpack.c.l.b16 %v225
    %v439 = vunpack.c.l.b16 %v226
    %v440 = vunpack.c.l.b16 %v227
    %v441 = vpack.c.b16 %v346, %v345
    %v442 = vpack.c.b16 %v348, %v347
    %v443 = vpack.c.b16 %v350, %v349
    %v444 = vpack.c.b16 %v352, %v351
    %v445 = vpack.c.b16 %v354, %v353
    %v446 = vpack.c.b16 %v356, %v355
    %v447 = vpack.c.b16 %v358, %v357
    %v448 = vpack.c.b16 %v360, %v359
    %v449 = vpack.c.b16 %v362, %v361
    %v450 = vpack.c.b16 %v364, %v363
    %v451 = vpack.c.b16 %v366, %v365
    %v452 = vpack.c.b16 %v368, %v367
    %v453 = vpack.c.b16 %v370, %v369
    %v454 = vpack.c.b16 %v372, %v371
    %v455 = vpack.c.b16 %v374, %v373
    %v456 = vpack.c.b16 %v376, %v375
    %v457 = vpack.c.b16 %v378, %v377
    %v458 = vpack.c.b16 %v380, %v379
    %v459 = vpack.c.b16 %v382, %v381
    %v460 = vpack.c.b16 %v384, %v383
    %v461 = vpack.c.b16 %v386, %v385
    %v462 = vpack.c.b16 %v388, %v387
    %v463 = vpack.c.b16 %v390, %v389
    %v464 = vpack.c.b16 %v392, %v391
    %v465 = vpack.c.b16 %v394, %v393
    %v466 = vpack.c.b16 %v396, %v395
    %v467 = vpack.c.b16 %v398, %v397
    %v468 = vpack.c.b16 %v400, %v399
    %v469 = vpack.c.b16 %v402, %v401
    %v470 = vpack.c.b16 %v404, %v403
    %v471 = vpack.c.b16 %v406, %v405
    %v472 = vpack.c.b16 %v408, %v407
    %v473 = vpack.c.b16 %v410, %v409
    %v474 = vpack.c.b16 %v412, %v411
    %v475 = vpack.c.b16 %v414, %v413
    %v476 = vpack.c.b16 %v416, %v415
    %v477 = vpack.c.b16 %v418, %v417
    %v478 = vpack.c.b16 %v420, %v419
    %v479 = vpack.c.b16 %v422, %v421
    %v480 = vpack.c.b16 %v424, %v423
    %v481 = vpack.c.b16 %v426, %v425
    %v482 = vpack.c.b16 %v428, %v427
    %v483 = vpack.c.b16 %v430, %v429
    %v484 = vpack.c.b16 %v432, %v431
    %v485 = vpack.c.b16 %v434, %v433
    %v486 = vpack.c.b16 %v436, %v435
    %v487 = vpack.c.b16 %v438, %v437
    %v488 = vpack.c.b16 %v440, %v439
    %537 = vmatprep.subr.bf16.mxu0 0
    %538 = vmatpush1.bf16.msra.mxu0 %v441
    %539 = vmatprep.subr.bf16.mxu0 0
    %540 = vmatpush1.bf16.msra.mxu0 %v442
    %541 = vmatprep.subr.bf16.mxu0 0
    %542 = vmatpush1.bf16.msra.mxu0 %v443
    %543 = vmatprep.subr.bf16.mxu0 0
    %544 = vmatpush1.bf16.msra.mxu0 %v444
    %545 = vmatprep.subr.bf16.mxu0 0
    %546 = vmatpush1.bf16.msra.mxu0 %v445
    %547 = vmatprep.subr.bf16.mxu0 0
    %548 = vmatpush1.bf16.msra.mxu0 %v446
    %549 = vmatprep.subr.bf16.mxu0 0
    %550 = vmatpush1.bf16.msra.mxu0 %v447
    %551 = vmatprep.subr.bf16.mxu0 0
    %552 = vmatpush1.bf16.msra.mxu0 %v448
    %553 = vmatprep.subr.bf16.mxu0 0
    %554 = vmatpush1.bf16.msra.mxu0 %v449
    %555 = vmatprep.subr.bf16.mxu0 0
    %556 = vmatpush1.bf16.msra.mxu0 %v450
    %557 = vmatprep.subr.bf16.mxu0 0
    %558 = vmatpush1.bf16.msra.mxu0 %v451
    %559 = vmatprep.subr.bf16.mxu0 0
    %560 = vmatpush1.bf16.msra.mxu0 %v452
    %561 = vmatprep.subr.bf16.mxu0 0
    %562 = vmatpush1.bf16.msra.mxu0 %v453
    %563 = vmatprep.subr.bf16.mxu0 0
    %564 = vmatpush1.bf16.msra.mxu0 %v454
    %565 = vmatprep.subr.bf16.mxu0 0
    %566 = vmatpush1.bf16.msra.mxu0 %v455
    %567 = vmatprep.subr.bf16.mxu0 0
    %568 = vmatpush1.bf16.msra.mxu0 %v456
    %569 = vmatprep.mubr.bf16.mxu0 %v238
    %570 = vmatmul.mubr.bf16.gmra.mrb[0].mxu0 %v237
    %v571 = vpop.f32.mrb[0].mxu0
    %v572 = vadd.f32 0.0, %v571
    %v573 = vpop.f32.mrb[0].mxu0
    %v574 = vpop.f32.mrb[0].mxu0
    %v575 = vpop.f32.mrb[0].mxu0
    %576 = vdwg.mxu0
    %577 = vmatprep.subr.bf16.mxu0 0
    %578 = vmatpush1.bf16.msra.mxu0 %v457
    %579 = vmatprep.subr.bf16.mxu0 0
    %580 = vmatpush1.bf16.msra.mxu0 %v458
    %581 = vmatprep.subr.bf16.mxu0 0
    %582 = vmatpush1.bf16.msra.mxu0 %v459
    %583 = vmatprep.subr.bf16.mxu0 0
    %584 = vmatpush1.bf16.msra.mxu0 %v460
    %585 = vmatprep.subr.bf16.mxu0 0
    %586 = vmatpush1.bf16.msra.mxu0 %v461
    %587 = vmatprep.subr.bf16.mxu0 0
    %588 = vmatpush1.bf16.msra.mxu0 %v462
    %589 = vmatprep.subr.bf16.mxu0 0
    %590 = vmatpush1.bf16.msra.mxu0 %v463
    %591 = vmatprep.subr.bf16.mxu0 0
    %592 = vmatpush1.bf16.msra.mxu0 %v464
    %593 = vmatprep.subr.bf16.mxu0 0
    %594 = vmatpush1.bf16.msra.mxu0 %v465
    %595 = vmatprep.subr.bf16.mxu0 0
    %596 = vmatpush1.bf16.msra.mxu0 %v466
    %597 = vmatprep.subr.bf16.mxu0 0
    %598 = vmatpush1.bf16.msra.mxu0 %v467
    %599 = vmatprep.subr.bf16.mxu0 0
    %600 = vmatpush1.bf16.msra.mxu0 %v468
    %601 = vmatprep.subr.bf16.mxu0 0
    %602 = vmatpush1.bf16.msra.mxu0 %v469
    %603 = vmatprep.subr.bf16.mxu0 0
    %604 = vmatpush1.bf16.msra.mxu0 %v470
    %605 = vmatprep.subr.bf16.mxu0 0
    %606 = vmatpush1.bf16.msra.mxu0 %v471
    %607 = vmatprep.subr.bf16.mxu0 0
    %608 = vmatpush1.bf16.msra.mxu0 %v472
    %609 = vmatprep.mubr.bf16.mxu0 %v240
    %610 = vmatmul.mubr.bf16.gmra.mrb[0].mxu0 %v239
    %v611 = vpop.f32.mrb[0].mxu0
    %v612 = vadd.f32 %v572, %v611
    %v613 = vpop.f32.mrb[0].mxu0
    %v614 = vpop.f32.mrb[0].mxu0
    %v615 = vpop.f32.mrb[0].mxu0
    %616 = vdwg.mxu0
    %617 = vmatprep.subr.bf16.mxu0 0
    %618 = vmatpush1.bf16.msra.mxu0 %v473
    %619 = vmatprep.subr.bf16.mxu0 0
    %620 = vmatpush1.bf16.msra.mxu0 %v474
    %621 = vmatprep.subr.bf16.mxu0 0
    %622 = vmatpush1.bf16.msra.mxu0 %v475
    %623 = vmatprep.subr.bf16.mxu0 0
    %624 = vmatpush1.bf16.msra.mxu0 %v476
    %625 = vmatprep.subr.bf16.mxu0 0
    %626 = vmatpush1.bf16.msra.mxu0 %v477
    %627 = vmatprep.subr.bf16.mxu0 0
    %628 = vmatpush1.bf16.msra.mxu0 %v478
    %629 = vmatprep.subr.bf16.mxu0 0
    %630 = vmatpush1.bf16.msra.mxu0 %v479
    %631 = vmatprep.subr.bf16.mxu0 0
    %632 = vmatpush1.bf16.msra.mxu0 %v480
    %633 = vmatprep.subr.bf16.mxu0 0
    %634 = vmatpush1.bf16.msra.mxu0 %v481
    %635 = vmatprep.subr.bf16.mxu0 0
    %636 = vmatpush1.bf16.msra.mxu0 %v482
    %637 = vmatprep.subr.bf16.mxu0 0
    %638 = vmatpush1.bf16.msra.mxu0 %v483
    %639 = vmatprep.subr.bf16.mxu0 0
    %640 = vmatpush1.bf16.msra.mxu0 %v484
    %641 = vmatprep.subr.bf16.mxu0 0
    %642 = vmatpush1.bf16.msra.mxu0 %v485
    %643 = vmatprep.subr.bf16.mxu0 0
    %644 = vmatpush1.bf16.msra.mxu0 %v486
    %645 = vmatprep.subr.bf16.mxu0 0
    %646 = vmatpush1.bf16.msra.mxu0 %v487
    %647 = vmatprep.subr.bf16.mxu0 0
    %648 = vmatpush1.bf16.msra.mxu0 %v488
    %649 = vmatprep.mubr.bf16.mxu0 %v242
    %650 = vmatmul.mubr.bf16.gmra.mrb[0].mxu0 %v241
    %v651 = vpop.f32.mrb[0].mxu0
    %v652 = vadd.f32 %v612, %v651
    %v653 = vpop.f32.mrb[0].mxu0
    %v654 = vpop.f32.mrb[0].mxu0
    %v655 = vpop.f32.mrb[0].mxu0
    %656 = vdwg.mxu0
    %v657 = vld [vmem:[#allocation7] sm:$0xff]
    %v658 = vld [vmem:[#allocation7 + $0x8] sm:$0xff]
    %v659 = vld [vmem:[#allocation7 + $0x10] sm:$0xff]
    %v660 = vld [vmem:[#allocation7 + $0x18] sm:$0xff]
    %v661 = vld [vmem:[#allocation7 + $0x20] sm:$0xff]
    %v662 = vld [vmem:[#allocation7 + $0x28] sm:$0xff]
    %v663 = vld [vmem:[#allocation7 + $0x30] sm:$0xff]
    %v664 = vld [vmem:[#allocation7 + $0x38] sm:$0xff]
    %v665 = vld [vmem:[#allocation7 + $0x40] sm:$0xff]
    %v666 = vld [vmem:[#allocation7 + $0x48] sm:$0xff]
    %v667 = vld [vmem:[#allocation7 + $0x50] sm:$0xff]
    %v668 = vld [vmem:[#allocation7 + $0x58] sm:$0xff]
    %v669 = vld [vmem:[#allocation7 + $0x60] sm:$0xff]
    %v670 = vld [vmem:[#allocation7 + $0x68] sm:$0xff]
    %v671 = vld [vmem:[#allocation7 + $0x70] sm:$0xff]
    %v672 = vld [vmem:[#allocation7 + $0x78] sm:$0xff]
    %v673 = vld [vmem:[#allocation7 + $0x80] sm:$0xff]
    %v674 = vld [vmem:[#allocation7 + $0x88] sm:$0xff]
    %v675 = vld [vmem:[#allocation7 + $0x90] sm:$0xff]
    %v676 = vld [vmem:[#allocation7 + $0x98] sm:$0xff]
    %v677 = vld [vmem:[#allocation7 + $0xa0] sm:$0xff]
    %v678 = vld [vmem:[#allocation7 + $0xa8] sm:$0xff]
    %v679 = vld [vmem:[#allocation7 + $0xb0] sm:$0xff]
    %v680 = vld [vmem:[#allocation7 + $0xb8] sm:$0xff]
    %v681 = vld [vmem:[#allocation7 + $0xc0] sm:$0xff]
    %v682 = vld [vmem:[#allocation7 + $0xc8] sm:$0xff]
    %v683 = vld [vmem:[#allocation7 + $0xd0] sm:$0xff]
    %v684 = vld [vmem:[#allocation7 + $0xd8] sm:$0xff]
    %v685 = vld [vmem:[#allocation7 + $0xe0] sm:$0xff]
    %v686 = vld [vmem:[#allocation7 + $0xe8] sm:$0xff]
    %v687 = vld [vmem:[#allocation7 + $0xf0] sm:$0xff]
    %v688 = vld [vmem:[#allocation7 + $0xf8] sm:$0xff]
    %v689 = vld [vmem:[#allocation7 + $0x100] sm:$0xff]
    %v690 = vld [vmem:[#allocation7 + $0x108] sm:$0xff]
    %v691 = vld [vmem:[#allocation7 + $0x110] sm:$0xff]
    %v692 = vld [vmem:[#allocation7 + $0x118] sm:$0xff]
    %v693 = vld [vmem:[#allocation7 + $0x120] sm:$0xff]
    %v694 = vld [vmem:[#allocation7 + $0x128] sm:$0xff]
    %v695 = vld [vmem:[#allocation7 + $0x130] sm:$0xff]
    %v696 = vld [vmem:[#allocation7 + $0x138] sm:$0xff]
    %v697 = vld [vmem:[#allocation7 + $0x140] sm:$0xff]
    %v698 = vld [vmem:[#allocation7 + $0x148] sm:$0xff]
    %v699 = vld [vmem:[#allocation7 + $0x150] sm:$0xff]
    %v700 = vld [vmem:[#allocation7 + $0x158] sm:$0xff]
    %v701 = vld [vmem:[#allocation7 + $0x160] sm:$0xff]
    %v702 = vld [vmem:[#allocation7 + $0x168] sm:$0xff]
    %v703 = vld [vmem:[#allocation7 + $0x170] sm:$0xff]
    %v704 = vld [vmem:[#allocation7 + $0x178] sm:$0xff]
    %v705 = vld [vmem:[#allocation7 + $0x180] sm:$0xff]
    %v706 = vld [vmem:[#allocation7 + $0x188] sm:$0xff]
    %v707 = vld [vmem:[#allocation7 + $0x190] sm:$0xff]
    %v708 = vld [vmem:[#allocation7 + $0x198] sm:$0xff]
    %v709 = vld [vmem:[#allocation7 + $0x1a0] sm:$0xff]
    %v710 = vld [vmem:[#allocation7 + $0x1a8] sm:$0xff]
    %v711 = vld [vmem:[#allocation7 + $0x1b0] sm:$0xff]
    %v712 = vld [vmem:[#allocation7 + $0x1b8] sm:$0xff]
    %v713 = vld [vmem:[#allocation7 + $0x1c0] sm:$0xff]
    %v714 = vld [vmem:[#allocation7 + $0x1c8] sm:$0xff]
    %v715 = vld [vmem:[#allocation7 + $0x1d0] sm:$0xff]
    %v716 = vld [vmem:[#allocation7 + $0x1d8] sm:$0xff]
    %v717 = vld [vmem:[#allocation7 + $0x1e0] sm:$0xff]
    %v718 = vld [vmem:[#allocation7 + $0x1e8] sm:$0xff]
    %v719 = vld [vmem:[#allocation7 + $0x1f0] sm:$0xff]
    %v720 = vld [vmem:[#allocation7 + $0x1f8] sm:$0xff]
    %v721 = vpack.c.bf16 %v652, %v652
    %v722 = vld [vmem:[#allocation10] sm:$0xff]
    %v723 = vld [vmem:[#allocation10 + $0x8] sm:$0xff]
    %v724 = vld [vmem:[#allocation10 + $0x10] sm:$0xff]
    %v725 = vld [vmem:[#allocation10 + $0x18] sm:$0xff]
    %v726 = vld [vmem:[#allocation10 + $0x20] sm:$0xff]
    %v727 = vld [vmem:[#allocation10 + $0x28] sm:$0xff]
    %v728 = vld [vmem:[#allocation10 + $0x30] sm:$0xff]
    %v729 = vld [vmem:[#allocation10 + $0x38] sm:$0xff]
    %v730 = vld [vmem:[#allocation10 + $0x40] sm:$0xff]
    %v731 = vld [vmem:[#allocation10 + $0x48] sm:$0xff]
    %v732 = vld [vmem:[#allocation10 + $0x50] sm:$0xff]
    %v733 = vld [vmem:[#allocation10 + $0x58] sm:$0xff]
    %v734 = vld [vmem:[#allocation10 + $0x60] sm:$0xff]
    %v735 = vld [vmem:[#allocation10 + $0x68] sm:$0xff]
    %v736 = vld [vmem:[#allocation10 + $0x70] sm:$0xff]
    %v737 = vld [vmem:[#allocation10 + $0x78] sm:$0xff]
    %v738 = vld [vmem:[#allocation10 + $0x80] sm:$0xff]
    %v739 = vld [vmem:[#allocation10 + $0x88] sm:$0xff]
    %v740 = vld [vmem:[#allocation10 + $0x90] sm:$0xff]
    %v741 = vld [vmem:[#allocation10 + $0x98] sm:$0xff]
    %v742 = vld [vmem:[#allocation10 + $0xa0] sm:$0xff]
    %v743 = vld [vmem:[#allocation10 + $0xa8] sm:$0xff]
    %v744 = vld [vmem:[#allocation10 + $0xb0] sm:$0xff]
    %v745 = vld [vmem:[#allocation10 + $0xb8] sm:$0xff]
    %v746 = vld [vmem:[#allocation10 + $0xc0] sm:$0xff]
    %v747 = vld [vmem:[#allocation10 + $0xc8] sm:$0xff]
    %v748 = vld [vmem:[#allocation10 + $0xd0] sm:$0xff]
    %v749 = vld [vmem:[#allocation10 + $0xd8] sm:$0xff]
    %v750 = vld [vmem:[#allocation10 + $0xe0] sm:$0xff]
    %v751 = vld [vmem:[#allocation10 + $0xe8] sm:$0xff]
    %v752 = vld [vmem:[#allocation10 + $0xf0] sm:$0xff]
    %v753 = vld [vmem:[#allocation10 + $0xf8] sm:$0xff]
    %v786 = vunpack.c.l.b16 %v722
    %v787 = vunpack.c.h.b16 %v722
    %v788 = vunpack.c.l.b16 %v723
    %v789 = vunpack.c.h.b16 %v723
    %v790 = vunpack.c.l.b16 %v724
    %v791 = vunpack.c.h.b16 %v724
    %v792 = vunpack.c.l.b16 %v725
    %v793 = vunpack.c.h.b16 %v725
    %v794 = vunpack.c.l.b16 %v726
    %v795 = vunpack.c.h.b16 %v726
    %v796 = vunpack.c.l.b16 %v727
    %v797 = vunpack.c.h.b16 %v727
    %v798 = vunpack.c.l.b16 %v728
    %v799 = vunpack.c.h.b16 %v728
    %v800 = vunpack.c.l.b16 %v729
    %v801 = vunpack.c.h.b16 %v729
    %v802 = vunpack.c.l.b16 %v730
    %v803 = vunpack.c.h.b16 %v730
    %v804 = vunpack.c.l.b16 %v731
    %v805 = vunpack.c.h.b16 %v731
    %v806 = vunpack.c.l.b16 %v732
    %v807 = vunpack.c.h.b16 %v732
    %v808 = vunpack.c.l.b16 %v733
    %v809 = vunpack.c.h.b16 %v733
    %v810 = vunpack.c.l.b16 %v734
    %v811 = vunpack.c.h.b16 %v734
    %v812 = vunpack.c.l.b16 %v735
    %v813 = vunpack.c.h.b16 %v735
    %v814 = vunpack.c.l.b16 %v736
    %v815 = vunpack.c.h.b16 %v736
    %v816 = vunpack.c.l.b16 %v737
    %v817 = vunpack.c.h.b16 %v737
    %v818 = vunpack.c.l.b16 %v738
    %v819 = vunpack.c.h.b16 %v738
    %v820 = vunpack.c.l.b16 %v739
    %v821 = vunpack.c.h.b16 %v739
    %v822 = vunpack.c.l.b16 %v740
    %v823 = vunpack.c.h.b16 %v740
    %v824 = vunpack.c.l.b16 %v741
    %v825 = vunpack.c.h.b16 %v741
    %v826 = vunpack.c.l.b16 %v742
    %v827 = vunpack.c.h.b16 %v742
    %v828 = vunpack.c.l.b16 %v743
    %v829 = vunpack.c.h.b16 %v743
    %v830 = vunpack.c.l.b16 %v744
    %v831 = vunpack.c.h.b16 %v744
    %v832 = vunpack.c.l.b16 %v745
    %v833 = vunpack.c.h.b16 %v745
    %v834 = vunpack.c.l.b16 %v746
    %v835 = vunpack.c.h.b16 %v746
    %v836 = vunpack.c.l.b16 %v747
    %v837 = vunpack.c.h.b16 %v747
    %v838 = vunpack.c.l.b16 %v748
    %v839 = vunpack.c.h.b16 %v748
    %v840 = vunpack.c.l.b16 %v749
    %v841 = vunpack.c.h.b16 %v749
    %v842 = vunpack.c.l.b16 %v750
    %v843 = vunpack.c.h.b16 %v750
    %v844 = vunpack.c.l.b16 %v751
    %v845 = vunpack.c.h.b16 %v751
    %v846 = vunpack.c.l.b16 %v752
    %v847 = vunpack.c.h.b16 %v752
    %v848 = vunpack.c.l.b16 %v753
    %v849 = vunpack.c.h.b16 %v753
    %v850 = vpack.c.b16 %v790, %v786
    %v851 = vpack.c.b16 %v791, %v787
    %v852 = vpack.c.b16 %v792, %v788
    %v853 = vpack.c.b16 %v793, %v789
    %v854 = vpack.c.b16 %v798, %v794
    %v855 = vpack.c.b16 %v799, %v795
    %v856 = vpack.c.b16 %v800, %v796
    %v857 = vpack.c.b16 %v801, %v797
    %v858 = vpack.c.b16 %v806, %v802
    %v859 = vpack.c.b16 %v807, %v803
    %v860 = vpack.c.b16 %v808, %v804
    %v861 = vpack.c.b16 %v809, %v805
    %v862 = vpack.c.b16 %v814, %v810
    %v863 = vpack.c.b16 %v815, %v811
    %v864 = vpack.c.b16 %v816, %v812
    %v865 = vpack.c.b16 %v817, %v813
    %v866 = vpack.c.b16 %v822, %v818
    %v867 = vpack.c.b16 %v823, %v819
    %v868 = vpack.c.b16 %v824, %v820
    %v869 = vpack.c.b16 %v825, %v821
    %v870 = vpack.c.b16 %v830, %v826
    %v871 = vpack.c.b16 %v831, %v827
    %v872 = vpack.c.b16 %v832, %v828
    %v873 = vpack.c.b16 %v833, %v829
    %v874 = vpack.c.b16 %v838, %v834
    %v875 = vpack.c.b16 %v839, %v835
    %v876 = vpack.c.b16 %v840, %v836
    %v877 = vpack.c.b16 %v841, %v837
    %v878 = vpack.c.b16 %v846, %v842
    %v879 = vpack.c.b16 %v847, %v843
    %v880 = vpack.c.b16 %v848, %v844
    %v881 = vpack.c.b16 %v849, %v845
    %914 = vmatprep.subr.bf16.mxu0 %v851
    %915 = vmatpush1.bf16.msra.mxu0 %v850
    %916 = vmatprep.subr.bf16.mxu0 %v855
    %917 = vmatpush1.bf16.msra.mxu0 %v854
    %918 = vmatprep.subr.bf16.mxu0 %v859
    %919 = vmatpush1.bf16.msra.mxu0 %v858
    %920 = vmatprep.subr.bf16.mxu0 %v863
    %921 = vmatpush1.bf16.msra.mxu0 %v862
    %922 = vmatprep.subr.bf16.mxu0 %v867
    %923 = vmatpush1.bf16.msra.mxu0 %v866
    %924 = vmatprep.subr.bf16.mxu0 %v871
    %925 = vmatpush1.bf16.msra.mxu0 %v870
    %926 = vmatprep.subr.bf16.mxu0 %v875
    %927 = vmatpush1.bf16.msra.mxu0 %v874
    %928 = vmatprep.subr.bf16.mxu0 %v879
    %929 = vmatpush1.bf16.msra.mxu0 %v878
    %930 = vmatprep.subr.bf16.mxu0 0
    %931 = vmatpush1.bf16.msra.mxu0 0
    %932 = vmatprep.subr.bf16.mxu0 0
    %933 = vmatpush1.bf16.msra.mxu0 0
    %934 = vmatprep.subr.bf16.mxu0 0
    %935 = vmatpush1.bf16.msra.mxu0 0
    %936 = vmatprep.subr.bf16.mxu0 0
    %937 = vmatpush1.bf16.msra.mxu0 0
    %938 = vmatprep.subr.bf16.mxu0 0
    %939 = vmatpush1.bf16.msra.mxu0 0
    %940 = vmatprep.subr.bf16.mxu0 0
    %941 = vmatpush1.bf16.msra.mxu0 0
    %942 = vmatprep.subr.bf16.mxu0 0
    %943 = vmatpush1.bf16.msra.mxu0 0
    %944 = vmatprep.subr.bf16.mxu0 0
    %945 = vmatpush1.bf16.msra.mxu0 0
    %946 = vmatprep.mubr.bf16.mxu0 0
    %947 = vmatmul.mubr.bf16.gmra.mrb[0].mxu0 %v721
    %v948 = vpop.f32.mrb[0].mxu0
    %v949 = vadd.f32 0.0, %v948
    %v950 = vpop.f32.mrb[0].mxu0
    %v951 = vadd.f32 0.0, %v950
    %v952 = vpop.f32.mrb[0].mxu0
    %v953 = vpop.f32.mrb[0].mxu0
    %954 = vdwg.mxu0
    %955 = vmatprep.subr.bf16.mxu0 %v853
    %956 = vmatpush1.bf16.msra.mxu0 %v852
    %957 = vmatprep.subr.bf16.mxu0 %v857
    %958 = vmatpush1.bf16.msra.mxu0 %v856
    %959 = vmatprep.subr.bf16.mxu0 %v861
    %960 = vmatpush1.bf16.msra.mxu0 %v860
    %961 = vmatprep.subr.bf16.mxu0 %v865
    %962 = vmatpush1.bf16.msra.mxu0 %v864
    %963 = vmatprep.subr.bf16.mxu0 %v869
    %964 = vmatpush1.bf16.msra.mxu0 %v868
    %965 = vmatprep.subr.bf16.mxu0 %v873
    %966 = vmatpush1.bf16.msra.mxu0 %v872
    %967 = vmatprep.subr.bf16.mxu0 %v877
    %968 = vmatpush1.bf16.msra.mxu0 %v876
    %969 = vmatprep.subr.bf16.mxu0 %v881
    %970 = vmatpush1.bf16.msra.mxu0 %v880
    %971 = vmatprep.subr.bf16.mxu0 0
    %972 = vmatpush1.bf16.msra.mxu0 0
    %973 = vmatprep.subr.bf16.mxu0 0
    %974 = vmatpush1.bf16.msra.mxu0 0
    %975 = vmatprep.subr.bf16.mxu0 0
    %976 = vmatpush1.bf16.msra.mxu0 0
    %977 = vmatprep.subr.bf16.mxu0 0
    %978 = vmatpush1.bf16.msra.mxu0 0
    %979 = vmatprep.subr.bf16.mxu0 0
    %980 = vmatpush1.bf16.msra.mxu0 0
    %981 = vmatprep.subr.bf16.mxu0 0
    %982 = vmatpush1.bf16.msra.mxu0 0
    %983 = vmatprep.subr.bf16.mxu0 0
    %984 = vmatpush1.bf16.msra.mxu0 0
    %985 = vmatprep.subr.bf16.mxu0 0
    %986 = vmatpush1.bf16.msra.mxu0 0
    %987 = vmatprep.mubr.bf16.mxu0 0
    %988 = vmatmul.mubr.bf16.gmra.mrb[0].mxu0 %v721
    %v989 = vpop.f32.mrb[0].mxu0
    %v990 = vadd.f32 0.0, %v989
    %v991 = vpop.f32.mrb[0].mxu0
    %v992 = vadd.f32 0.0, %v991
    %v993 = vpop.f32.mrb[0].mxu0
    %v994 = vpop.f32.mrb[0].mxu0
    %995 = vdwg.mxu0
    %v997 = vunpack.c.l.b16 %v125
    %v998 = vunpack.c.h.b16 %v125
    %v999 = vpack.c.b16 %v997, %v997
    %v1000 = vpack.c.b16 %v998, %v998
    %v1067 = vunpack.c.l.b16 %v657
    %v1068 = vunpack.c.h.b16 %v657
    %v1069 = vunpack.c.l.b16 %v658
    %v1070 = vunpack.c.h.b16 %v658
    %v1071 = vunpack.c.l.b16 %v659
    %v1072 = vunpack.c.h.b16 %v659
    %v1073 = vunpack.c.l.b16 %v660
    %v1074 = vunpack.c.h.b16 %v660
    %v1075 = vunpack.c.l.b16 %v661
    %v1076 = vunpack.c.h.b16 %v661
    %v1077 = vunpack.c.l.b16 %v662
    %v1078 = vunpack.c.h.b16 %v662
    %v1079 = vunpack.c.l.b16 %v663
    %v1080 = vunpack.c.h.b16 %v663
    %v1081 = vunpack.c.l.b16 %v664
    %v1082 = vunpack.c.h.b16 %v664
    %v1083 = vunpack.c.l.b16 %v665
    %v1084 = vunpack.c.h.b16 %v665
    %v1085 = vunpack.c.l.b16 %v666
    %v1086 = vunpack.c.h.b16 %v666
    %v1087 = vunpack.c.l.b16 %v667
    %v1088 = vunpack.c.h.b16 %v667
    %v1089 = vunpack.c.l.b16 %v668
    %v1090 = vunpack.c.h.b16 %v668
    %v1091 = vunpack.c.l.b16 %v669
    %v1092 = vunpack.c.h.b16 %v669
    %v1093 = vunpack.c.l.b16 %v670
    %v1094 = vunpack.c.h.b16 %v670
    %v1095 = vunpack.c.l.b16 %v671
    %v1096 = vunpack.c.h.b16 %v671
    %v1097 = vunpack.c.l.b16 %v672
    %v1098 = vunpack.c.h.b16 %v672
    %v1099 = vunpack.c.l.b16 %v673
    %v1100 = vunpack.c.h.b16 %v673
    %v1101 = vunpack.c.l.b16 %v674
    %v1102 = vunpack.c.h.b16 %v674
    %v1103 = vunpack.c.l.b16 %v675
    %v1104 = vunpack.c.h.b16 %v675
    %v1105 = vunpack.c.l.b16 %v676
    %v1106 = vunpack.c.h.b16 %v676
    %v1107 = vunpack.c.l.b16 %v677
    %v1108 = vunpack.c.h.b16 %v677
    %v1109 = vunpack.c.l.b16 %v678
    %v1110 = vunpack.c.h.b16 %v678
    %v1111 = vunpack.c.l.b16 %v679
    %v1112 = vunpack.c.h.b16 %v679
    %v1113 = vunpack.c.l.b16 %v680
    %v1114 = vunpack.c.h.b16 %v680
    %v1115 = vunpack.c.l.b16 %v681
    %v1116 = vunpack.c.h.b16 %v681
    %v1117 = vunpack.c.l.b16 %v682
    %v1118 = vunpack.c.h.b16 %v682
    %v1119 = vunpack.c.l.b16 %v683
    %v1120 = vunpack.c.h.b16 %v683
    %v1121 = vunpack.c.l.b16 %v684
    %v1122 = vunpack.c.h.b16 %v684
    %v1123 = vunpack.c.l.b16 %v685
    %v1124 = vunpack.c.h.b16 %v685
    %v1125 = vunpack.c.l.b16 %v686
    %v1126 = vunpack.c.h.b16 %v686
    %v1127 = vunpack.c.l.b16 %v687
    %v1128 = vunpack.c.h.b16 %v687
    %v1129 = vunpack.c.l.b16 %v688
    %v1130 = vunpack.c.h.b16 %v688
    %v1131 = vunpack.c.l.b16 %v689
    %v1132 = vunpack.c.h.b16 %v689
    %v1133 = vunpack.c.l.b16 %v690
    %v1134 = vunpack.c.h.b16 %v690
    %v1135 = vunpack.c.l.b16 %v691
    %v1136 = vunpack.c.h.b16 %v691
    %v1137 = vunpack.c.l.b16 %v692
    %v1138 = vunpack.c.h.b16 %v692
    %v1139 = vunpack.c.l.b16 %v693
    %v1140 = vunpack.c.h.b16 %v693
    %v1141 = vunpack.c.l.b16 %v694
    %v1142 = vunpack.c.h.b16 %v694
    %v1143 = vunpack.c.l.b16 %v695
    %v1144 = vunpack.c.h.b16 %v695
    %v1145 = vunpack.c.l.b16 %v696
    %v1146 = vunpack.c.h.b16 %v696
    %v1147 = vunpack.c.l.b16 %v697
    %v1148 = vunpack.c.h.b16 %v697
    %v1149 = vunpack.c.l.b16 %v698
    %v1150 = vunpack.c.h.b16 %v698
    %v1151 = vunpack.c.l.b16 %v699
    %v1152 = vunpack.c.h.b16 %v699
    %v1153 = vunpack.c.l.b16 %v700
    %v1154 = vunpack.c.h.b16 %v700
    %v1155 = vunpack.c.l.b16 %v701
    %v1156 = vunpack.c.h.b16 %v701
    %v1157 = vunpack.c.l.b16 %v702
    %v1158 = vunpack.c.h.b16 %v702
    %v1159 = vunpack.c.l.b16 %v703
    %v1160 = vunpack.c.h.b16 %v703
    %v1161 = vunpack.c.l.b16 %v704
    %v1162 = vunpack.c.h.b16 %v704
    %v1163 = vunpack.c.l.b16 %v705
    %v1164 = vunpack.c.h.b16 %v705
    %v1165 = vunpack.c.l.b16 %v706
    %v1166 = vunpack.c.h.b16 %v706
    %v1167 = vunpack.c.l.b16 %v707
    %v1168 = vunpack.c.h.b16 %v707
    %v1169 = vunpack.c.l.b16 %v708
    %v1170 = vunpack.c.h.b16 %v708
    %v1171 = vunpack.c.l.b16 %v709
    %v1172 = vunpack.c.h.b16 %v709
    %v1173 = vunpack.c.l.b16 %v710
    %v1174 = vunpack.c.h.b16 %v710
    %v1175 = vunpack.c.l.b16 %v711
    %v1176 = vunpack.c.h.b16 %v711
    %v1177 = vunpack.c.l.b16 %v712
    %v1178 = vunpack.c.h.b16 %v712
    %v1179 = vunpack.c.l.b16 %v713
    %v1180 = vunpack.c.h.b16 %v713
    %v1181 = vunpack.c.l.b16 %v714
    %v1182 = vunpack.c.h.b16 %v714
    %v1183 = vunpack.c.l.b16 %v715
    %v1184 = vunpack.c.h.b16 %v715
    %v1185 = vunpack.c.l.b16 %v716
    %v1186 = vunpack.c.h.b16 %v716
    %v1187 = vunpack.c.l.b16 %v717
    %v1188 = vunpack.c.h.b16 %v717
    %v1189 = vunpack.c.l.b16 %v718
    %v1190 = vunpack.c.h.b16 %v718
    %v1191 = vunpack.c.l.b16 %v719
    %v1192 = vunpack.c.h.b16 %v719
    %v1193 = vunpack.c.l.b16 %v720
    %v1194 = vunpack.c.h.b16 %v720
    %v1195 = vpack.c.b16 %v1071, %v1067
    %v1196 = vpack.c.b16 %v1072, %v1068
    %v1197 = vpack.c.b16 %v1073, %v1069
    %v1198 = vpack.c.b16 %v1074, %v1070
    %v1199 = vpack.c.b16 %v1079, %v1075
    %v1200 = vpack.c.b16 %v1080, %v1076
    %v1201 = vpack.c.b16 %v1081, %v1077
    %v1202 = vpack.c.b16 %v1082, %v1078
    %v1203 = vpack.c.b16 %v1087, %v1083
    %v1204 = vpack.c.b16 %v1088, %v1084
    %v1205 = vpack.c.b16 %v1089, %v1085
    %v1206 = vpack.c.b16 %v1090, %v1086
    %v1207 = vpack.c.b16 %v1095, %v1091
    %v1208 = vpack.c.b16 %v1096, %v1092
    %v1209 = vpack.c.b16 %v1097, %v1093
    %v1210 = vpack.c.b16 %v1098, %v1094
    %v1211 = vpack.c.b16 %v1103, %v1099
    %v1212 = vpack.c.b16 %v1104, %v1100
    %v1213 = vpack.c.b16 %v1105, %v1101
    %v1214 = vpack.c.b16 %v1106, %v1102
    %v1215 = vpack.c.b16 %v1111, %v1107
    %v1216 = vpack.c.b16 %v1112, %v1108
    %v1217 = vpack.c.b16 %v1113, %v1109
    %v1218 = vpack.c.b16 %v1114, %v1110
    %v1219 = vpack.c.b16 %v1119, %v1115
    %v1220 = vpack.c.b16 %v1120, %v1116
    %v1221 = vpack.c.b16 %v1121, %v1117
    %v1222 = vpack.c.b16 %v1122, %v1118
    %v1223 = vpack.c.b16 %v1127, %v1123
    %v1224 = vpack.c.b16 %v1128, %v1124
    %v1225 = vpack.c.b16 %v1129, %v1125
    %v1226 = vpack.c.b16 %v1130, %v1126
    %v1227 = vpack.c.b16 %v1135, %v1131
    %v1228 = vpack.c.b16 %v1136, %v1132
    %v1229 = vpack.c.b16 %v1137, %v1133
    %v1230 = vpack.c.b16 %v1138, %v1134
    %v1231 = vpack.c.b16 %v1143, %v1139
    %v1232 = vpack.c.b16 %v1144, %v1140
    %v1233 = vpack.c.b16 %v1145, %v1141
    %v1234 = vpack.c.b16 %v1146, %v1142
    %v1235 = vpack.c.b16 %v1151, %v1147
    %v1236 = vpack.c.b16 %v1152, %v1148
    %v1237 = vpack.c.b16 %v1153, %v1149
    %v1238 = vpack.c.b16 %v1154, %v1150
    %v1239 = vpack.c.b16 %v1159, %v1155
    %v1240 = vpack.c.b16 %v1160, %v1156
    %v1241 = vpack.c.b16 %v1161, %v1157
    %v1242 = vpack.c.b16 %v1162, %v1158
    %v1243 = vpack.c.b16 %v1167, %v1163
    %v1244 = vpack.c.b16 %v1168, %v1164
    %v1245 = vpack.c.b16 %v1169, %v1165
    %v1246 = vpack.c.b16 %v1170, %v1166
    %v1247 = vpack.c.b16 %v1175, %v1171
    %v1248 = vpack.c.b16 %v1176, %v1172
    %v1249 = vpack.c.b16 %v1177, %v1173
    %v1250 = vpack.c.b16 %v1178, %v1174
    %v1251 = vpack.c.b16 %v1183, %v1179
    %v1252 = vpack.c.b16 %v1184, %v1180
    %v1253 = vpack.c.b16 %v1185, %v1181
    %v1254 = vpack.c.b16 %v1186, %v1182
    %v1255 = vpack.c.b16 %v1191, %v1187
    %v1256 = vpack.c.b16 %v1192, %v1188
    %v1257 = vpack.c.b16 %v1193, %v1189
    %v1258 = vpack.c.b16 %v1194, %v1190
    %1323 = vmatprep.subr.bf16.mxu0 %v1196
    %1324 = vmatpush1.bf16.msra.mxu0 %v1195
    %1325 = vmatprep.subr.bf16.mxu0 %v1200
    %1326 = vmatpush1.bf16.msra.mxu0 %v1199
    %1327 = vmatprep.subr.bf16.mxu0 %v1204
    %1328 = vmatpush1.bf16.msra.mxu0 %v1203
    %1329 = vmatprep.subr.bf16.mxu0 %v1208
    %1330 = vmatpush1.bf16.msra.mxu0 %v1207
    %1331 = vmatprep.subr.bf16.mxu0 %v1212
    %1332 = vmatpush1.bf16.msra.mxu0 %v1211
    %1333 = vmatprep.subr.bf16.mxu0 %v1216
    %1334 = vmatpush1.bf16.msra.mxu0 %v1215
    %1335 = vmatprep.subr.bf16.mxu0 %v1220
    %1336 = vmatpush1.bf16.msra.mxu0 %v1219
    %1337 = vmatprep.subr.bf16.mxu0 %v1224
    %1338 = vmatpush1.bf16.msra.mxu0 %v1223
    %1339 = vmatprep.subr.bf16.mxu0 %v1228
    %1340 = vmatpush1.bf16.msra.mxu0 %v1227
    %1341 = vmatprep.subr.bf16.mxu0 %v1232
    %1342 = vmatpush1.bf16.msra.mxu0 %v1231
    %1343 = vmatprep.subr.bf16.mxu0 %v1236
    %1344 = vmatpush1.bf16.msra.mxu0 %v1235
    %1345 = vmatprep.subr.bf16.mxu0 %v1240
    %1346 = vmatpush1.bf16.msra.mxu0 %v1239
    %1347 = vmatprep.subr.bf16.mxu0 %v1244
    %1348 = vmatpush1.bf16.msra.mxu0 %v1243
    %1349 = vmatprep.subr.bf16.mxu0 %v1248
    %1350 = vmatpush1.bf16.msra.mxu0 %v1247
    %1351 = vmatprep.subr.bf16.mxu0 %v1252
    %1352 = vmatpush1.bf16.msra.mxu0 %v1251
    %1353 = vmatprep.subr.bf16.mxu0 %v1256
    %1354 = vmatpush1.bf16.msra.mxu0 %v1255
    %1355 = vmatprep.mubr.bf16.mxu0 %v1000
    %1356 = vmatmul.mubr.bf16.gmra.mrb[0].mxu0 %v999
    %v1357 = vpop.f32.mrb[0].mxu0
    %v1358 = vadd.f32 %v949, %v1357
    %v1359 = vpop.f32.mrb[0].mxu0
    %v1360 = vadd.f32 %v951, %v1359
    %v1361 = vpop.f32.mrb[0].mxu0
    %v1362 = vpop.f32.mrb[0].mxu0
    %1363 = vdwg.mxu0
    %1364 = vmatprep.subr.bf16.mxu0 %v1198
    %1365 = vmatpush1.bf16.msra.mxu0 %v1197
    %1366 = vmatprep.subr.bf16.mxu0 %v1202
    %1367 = vmatpush1.bf16.msra.mxu0 %v1201
    %1368 = vmatprep.subr.bf16.mxu0 %v1206
    %1369 = vmatpush1.bf16.msra.mxu0 %v1205
    %1370 = vmatprep.subr.bf16.mxu0 %v1210
    %1371 = vmatpush1.bf16.msra.mxu0 %v1209
    %1372 = vmatprep.subr.bf16.mxu0 %v1214
    %1373 = vmatpush1.bf16.msra.mxu0 %v1213
    %1374 = vmatprep.subr.bf16.mxu0 %v1218
    %1375 = vmatpush1.bf16.msra.mxu0 %v1217
    %1376 = vmatprep.subr.bf16.mxu0 %v1222
    %1377 = vmatpush1.bf16.msra.mxu0 %v1221
    %1378 = vmatprep.subr.bf16.mxu0 %v1226
    %1379 = vmatpush1.bf16.msra.mxu0 %v1225
    %1380 = vmatprep.subr.bf16.mxu0 %v1230
    %1381 = vmatpush1.bf16.msra.mxu0 %v1229
    %1382 = vmatprep.subr.bf16.mxu0 %v1234
    %1383 = vmatpush1.bf16.msra.mxu0 %v1233
    %1384 = vmatprep.subr.bf16.mxu0 %v1238
    %1385 = vmatpush1.bf16.msra.mxu0 %v1237
    %1386 = vmatprep.subr.bf16.mxu0 %v1242
    %1387 = vmatpush1.bf16.msra.mxu0 %v1241
    %1388 = vmatprep.subr.bf16.mxu0 %v1246
    %1389 = vmatpush1.bf16.msra.mxu0 %v1245
    %1390 = vmatprep.subr.bf16.mxu0 %v1250
    %1391 = vmatpush1.bf16.msra.mxu0 %v1249
    %1392 = vmatprep.subr.bf16.mxu0 %v1254
    %1393 = vmatpush1.bf16.msra.mxu0 %v1253
    %1394 = vmatprep.subr.bf16.mxu0 %v1258
    %1395 = vmatpush1.bf16.msra.mxu0 %v1257
    %1396 = vmatprep.mubr.bf16.mxu0 %v1000
    %1397 = vmatmul.mubr.bf16.gmra.mrb[0].mxu0 %v999
    %v1398 = vpop.f32.mrb[0].mxu0
    %v1399 = vadd.f32 %v990, %v1398
    %v1400 = vpop.f32.mrb[0].mxu0
    %v1401 = vadd.f32 %v992, %v1400
    %v1402 = vpop.f32.mrb[0].mxu0
    %v1403 = vpop.f32.mrb[0].mxu0
    %1404 = vdwg.mxu0
    %v1406 = vlaneseq
    %v1407 = vshrl.u32 %v1406, 7
    %v1408 = vsub.s32 0, %v1407
    %v1409 = vrot.slane %v129, %v1408
    %v1410 = vlaneseq
    %v1411 = vshrl.u32 %v1410, 7
    %v1412 = vsub.s32 1, %v1411
    %v1413 = vrot.slane %v129, %v1412
    %v1414 = vlaneseq
    %v1415 = vshrl.u32 %v1414, 7
    %v1416 = vsub.s32 2, %v1415
    %v1417 = vrot.slane %v129, %v1416
    %v1418 = vlaneseq
    %v1419 = vshrl.u32 %v1418, 7
    %v1420 = vsub.s32 3, %v1419
    %v1421 = vrot.slane %v129, %v1420
    %v1426 = vadd.f32 %v1358, %v1409
    %v1427 = vadd.f32 %v1360, %v1413
    %v1428 = vadd.f32 %v1399, %v1417
    %v1429 = vadd.f32 %v1401, %v1421
    %v1430 = vmax.f32 %v1426, 0.0
    %v1431 = vmax.f32 %v1427, 0.0
    %v1432 = vmax.f32 %v1428, 0.0
    %v1433 = vmax.f32 %v1429, 0.0
    %v1434 = vpack.c.bf16 %v1430, %v1430
    %v1435 = vpack.c.bf16 %v1431, %v1431
    %v1436 = vpack.c.bf16 %v1432, %v1432
    %v1437 = vpack.c.bf16 %v1433, %v1433
    %v1438 = vld [vmem:[#allocation11] sm:$0xff]
    %v1439 = vld [vmem:[#allocation11 + $0x8] sm:$0xff]
    %v1440 = vld [vmem:[#allocation11 + $0x10] sm:$0xff]
    %v1441 = vld [vmem:[#allocation11 + $0x18] sm:$0xff]
    %v1442 = vld [vmem:[#allocation11 + $0x20] sm:$0xff]
    %v1443 = vld [vmem:[#allocation11 + $0x28] sm:$0xff]
    %v1444 = vld [vmem:[#allocation11 + $0x30] sm:$0xff]
    %v1445 = vld [vmem:[#allocation11 + $0x38] sm:$0xff]
    %v1446 = vld [vmem:[#allocation11 + $0x40] sm:$0xff]
    %v1447 = vld [vmem:[#allocation11 + $0x48] sm:$0xff]
    %v1448 = vld [vmem:[#allocation11 + $0x50] sm:$0xff]
    %v1449 = vld [vmem:[#allocation11 + $0x58] sm:$0xff]
    %v1450 = vld [vmem:[#allocation11 + $0x60] sm:$0xff]
    %v1451 = vld [vmem:[#allocation11 + $0x68] sm:$0xff]
    %v1452 = vld [vmem:[#allocation11 + $0x70] sm:$0xff]
    %v1453 = vld [vmem:[#allocation11 + $0x78] sm:$0xff]
    %v1454 = vld [vmem:[#allocation11 + $0x80] sm:$0xff]
    %v1455 = vld [vmem:[#allocation11 + $0x88] sm:$0xff]
    %v1456 = vld [vmem:[#allocation11 + $0x90] sm:$0xff]
    %v1457 = vld [vmem:[#allocation11 + $0x98] sm:$0xff]
    %v1458 = vld [vmem:[#allocation11 + $0xa0] sm:$0xff]
    %v1459 = vld [vmem:[#allocation11 + $0xa8] sm:$0xff]
    %v1460 = vld [vmem:[#allocation11 + $0xb0] sm:$0xff]
    %v1461 = vld [vmem:[#allocation11 + $0xb8] sm:$0xff]
    %v1462 = vld [vmem:[#allocation11 + $0xc0] sm:$0xff]
    %v1463 = vld [vmem:[#allocation11 + $0xc8] sm:$0xff]
    %v1464 = vld [vmem:[#allocation11 + $0xd0] sm:$0xff]
    %v1465 = vld [vmem:[#allocation11 + $0xd8] sm:$0xff]
    %v1466 = vld [vmem:[#allocation11 + $0xe0] sm:$0xff]
    %v1467 = vld [vmem:[#allocation11 + $0xe8] sm:$0xff]
    %v1468 = vld [vmem:[#allocation11 + $0xf0] sm:$0xff]
    %v1469 = vld [vmem:[#allocation11 + $0xf8] sm:$0xff]
    %v1470 = vld [vmem:[#allocation11 + $0x100] sm:$0xff]
    %v1471 = vld [vmem:[#allocation11 + $0x108] sm:$0xff]
    %v1472 = vld [vmem:[#allocation11 + $0x110] sm:$0xff]
    %v1473 = vld [vmem:[#allocation11 + $0x118] sm:$0xff]
    %v1474 = vld [vmem:[#allocation11 + $0x120] sm:$0xff]
    %v1475 = vld [vmem:[#allocation11 + $0x128] sm:$0xff]
    %v1476 = vld [vmem:[#allocation11 + $0x130] sm:$0xff]
    %v1477 = vld [vmem:[#allocation11 + $0x138] sm:$0xff]
    %v1478 = vld [vmem:[#allocation11 + $0x140] sm:$0xff]
    %v1479 = vld [vmem:[#allocation11 + $0x148] sm:$0xff]
    %v1480 = vld [vmem:[#allocation11 + $0x150] sm:$0xff]
    %v1481 = vld [vmem:[#allocation11 + $0x158] sm:$0xff]
    %v1482 = vld [vmem:[#allocation11 + $0x160] sm:$0xff]
    %v1483 = vld [vmem:[#allocation11 + $0x168] sm:$0xff]
    %v1484 = vld [vmem:[#allocation11 + $0x170] sm:$0xff]
    %v1485 = vld [vmem:[#allocation11 + $0x178] sm:$0xff]
    %v1486 = vld [vmem:[#allocation11 + $0x180] sm:$0xff]
    %v1487 = vld [vmem:[#allocation11 + $0x188] sm:$0xff]
    %v1488 = vld [vmem:[#allocation11 + $0x190] sm:$0xff]
    %v1489 = vld [vmem:[#allocation11 + $0x198] sm:$0xff]
    %v1490 = vld [vmem:[#allocation11 + $0x1a0] sm:$0xff]
    %v1491 = vld [vmem:[#allocation11 + $0x1a8] sm:$0xff]
    %v1492 = vld [vmem:[#allocation11 + $0x1b0] sm:$0xff]
    %v1493 = vld [vmem:[#allocation11 + $0x1b8] sm:$0xff]
    %v1494 = vld [vmem:[#allocation11 + $0x1c0] sm:$0xff]
    %v1495 = vld [vmem:[#allocation11 + $0x1c8] sm:$0xff]
    %v1496 = vld [vmem:[#allocation11 + $0x1d0] sm:$0xff]
    %v1497 = vld [vmem:[#allocation11 + $0x1d8] sm:$0xff]
    %v1498 = vld [vmem:[#allocation11 + $0x1e0] sm:$0xff]
    %v1499 = vld [vmem:[#allocation11 + $0x1e8] sm:$0xff]
    %v1500 = vld [vmem:[#allocation11 + $0x1f0] sm:$0xff]
    %v1501 = vld [vmem:[#allocation11 + $0x1f8] sm:$0xff]
    %v1502 = vld [vmem:[#allocation11 + $0x200] sm:$0xff]
    %v1503 = vld [vmem:[#allocation11 + $0x208] sm:$0xff]
    %v1504 = vld [vmem:[#allocation11 + $0x210] sm:$0xff]
    %v1505 = vld [vmem:[#allocation11 + $0x218] sm:$0xff]
    %v1506 = vld [vmem:[#allocation11 + $0x220] sm:$0xff]
    %v1507 = vld [vmem:[#allocation11 + $0x228] sm:$0xff]
    %v1508 = vld [vmem:[#allocation11 + $0x230] sm:$0xff]
    %v1509 = vld [vmem:[#allocation11 + $0x238] sm:$0xff]
    %v1510 = vld [vmem:[#allocation11 + $0x240] sm:$0xff]
    %v1511 = vld [vmem:[#allocation11 + $0x248] sm:$0xff]
    %v1512 = vld [vmem:[#allocation11 + $0x250] sm:$0xff]
    %v1513 = vld [vmem:[#allocation11 + $0x258] sm:$0xff]
    %v1514 = vld [vmem:[#allocation11 + $0x260] sm:$0xff]
    %v1515 = vld [vmem:[#allocation11 + $0x268] sm:$0xff]
    %v1516 = vld [vmem:[#allocation11 + $0x270] sm:$0xff]
    %v1517 = vld [vmem:[#allocation11 + $0x278] sm:$0xff]
    %v1518 = vld [vmem:[#allocation11 + $0x280] sm:$0xff]
    %v1519 = vld [vmem:[#allocation11 + $0x288] sm:$0xff]
    %v1520 = vld [vmem:[#allocation11 + $0x290] sm:$0xff]
    %v1521 = vld [vmem:[#allocation11 + $0x298] sm:$0xff]
    %v1522 = vld [vmem:[#allocation11 + $0x2a0] sm:$0xff]
    %v1523 = vld [vmem:[#allocation11 + $0x2a8] sm:$0xff]
    %v1524 = vld [vmem:[#allocation11 + $0x2b0] sm:$0xff]
    %v1525 = vld [vmem:[#allocation11 + $0x2b8] sm:$0xff]
    %v1526 = vld [vmem:[#allocation11 + $0x2c0] sm:$0xff]
    %v1527 = vld [vmem:[#allocation11 + $0x2c8] sm:$0xff]
    %v1528 = vld [vmem:[#allocation11 + $0x2d0] sm:$0xff]
    %v1529 = vld [vmem:[#allocation11 + $0x2d8] sm:$0xff]
    %v1530 = vld [vmem:[#allocation11 + $0x2e0] sm:$0xff]
    %v1531 = vld [vmem:[#allocation11 + $0x2e8] sm:$0xff]
    %v1532 = vld [vmem:[#allocation11 + $0x2f0] sm:$0xff]
    %v1533 = vld [vmem:[#allocation11 + $0x2f8] sm:$0xff]
    %v1534 = vld [vmem:[#allocation11 + $0x300] sm:$0xff]
    %v1535 = vld [vmem:[#allocation11 + $0x308] sm:$0xff]
    %v1536 = vld [vmem:[#allocation11 + $0x310] sm:$0xff]
    %v1537 = vld [vmem:[#allocation11 + $0x318] sm:$0xff]
    %v1538 = vld [vmem:[#allocation11 + $0x320] sm:$0xff]
    %v1539 = vld [vmem:[#allocation11 + $0x328] sm:$0xff]
    %v1540 = vld [vmem:[#allocation11 + $0x330] sm:$0xff]
    %v1541 = vld [vmem:[#allocation11 + $0x338] sm:$0xff]
    %v1542 = vld [vmem:[#allocation11 + $0x340] sm:$0xff]
    %v1543 = vld [vmem:[#allocation11 + $0x348] sm:$0xff]
    %v1544 = vld [vmem:[#allocation11 + $0x350] sm:$0xff]
    %v1545 = vld [vmem:[#allocation11 + $0x358] sm:$0xff]
    %v1546 = vld [vmem:[#allocation11 + $0x360] sm:$0xff]
    %v1547 = vld [vmem:[#allocation11 + $0x368] sm:$0xff]
    %v1548 = vld [vmem:[#allocation11 + $0x370] sm:$0xff]
    %v1549 = vld [vmem:[#allocation11 + $0x378] sm:$0xff]
    %v1550 = vld [vmem:[#allocation11 + $0x380] sm:$0xff]
    %v1551 = vld [vmem:[#allocation11 + $0x388] sm:$0xff]
    %v1552 = vld [vmem:[#allocation11 + $0x390] sm:$0xff]
    %v1553 = vld [vmem:[#allocation11 + $0x398] sm:$0xff]
    %v1554 = vld [vmem:[#allocation11 + $0x3a0] sm:$0xff]
    %v1555 = vld [vmem:[#allocation11 + $0x3a8] sm:$0xff]
    %v1556 = vld [vmem:[#allocation11 + $0x3b0] sm:$0xff]
    %v1557 = vld [vmem:[#allocation11 + $0x3b8] sm:$0xff]
    %v1558 = vld [vmem:[#allocation11 + $0x3c0] sm:$0xff]
    %v1559 = vld [vmem:[#allocation11 + $0x3c8] sm:$0xff]
    %v1560 = vld [vmem:[#allocation11 + $0x3d0] sm:$0xff]
    %v1561 = vld [vmem:[#allocation11 + $0x3d8] sm:$0xff]
    %v1562 = vld [vmem:[#allocation11 + $0x3e0] sm:$0xff]
    %v1563 = vld [vmem:[#allocation11 + $0x3e8] sm:$0xff]
    %v1564 = vld [vmem:[#allocation11 + $0x3f0] sm:$0xff]
    %v1565 = vld [vmem:[#allocation11 + $0x3f8] sm:$0xff]
    %v1567 = vlaneseq
    %v1568 = vshrl.u32 %v1567, 7
    %v1569 = vsub.s32 0, %v1568
    %v1570 = vrot.slane %v130, %v1569
    %v1571 = vlaneseq
    %v1572 = vshrl.u32 %v1571, 7
    %v1573 = vsub.s32 1, %v1572
    %v1574 = vrot.slane %v130, %v1573
    %v1575 = vlaneseq
    %v1576 = vshrl.u32 %v1575, 7
    %v1577 = vsub.s32 2, %v1576
    %v1578 = vrot.slane %v130, %v1577
    %v1579 = vlaneseq
    %v1580 = vshrl.u32 %v1579, 7
    %v1581 = vsub.s32 3, %v1580
    %v1582 = vrot.slane %v130, %v1581
    %v1715 = vunpack.c.l.b16 %v1438
    %v1716 = vunpack.c.h.b16 %v1438
    %v1717 = vunpack.c.l.b16 %v1439
    %v1718 = vunpack.c.h.b16 %v1439
    %v1719 = vunpack.c.l.b16 %v1440
    %v1720 = vunpack.c.h.b16 %v1440
    %v1721 = vunpack.c.l.b16 %v1441
    %v1722 = vunpack.c.h.b16 %v1441
    %v1723 = vunpack.c.l.b16 %v1442
    %v1724 = vunpack.c.h.b16 %v1442
    %v1725 = vunpack.c.l.b16 %v1443
    %v1726 = vunpack.c.h.b16 %v1443
    %v1727 = vunpack.c.l.b16 %v1444
    %v1728 = vunpack.c.h.b16 %v1444
    %v1729 = vunpack.c.l.b16 %v1445
    %v1730 = vunpack.c.h.b16 %v1445
    %v1731 = vunpack.c.l.b16 %v1446
    %v1732 = vunpack.c.h.b16 %v1446
    %v1733 = vunpack.c.l.b16 %v1447
    %v1734 = vunpack.c.h.b16 %v1447
    %v1735 = vunpack.c.l.b16 %v1448
    %v1736 = vunpack.c.h.b16 %v1448
    %v1737 = vunpack.c.l.b16 %v1449
    %v1738 = vunpack.c.h.b16 %v1449
    %v1739 = vunpack.c.l.b16 %v1450
    %v1740 = vunpack.c.h.b16 %v1450
    %v1741 = vunpack.c.l.b16 %v1451
    %v1742 = vunpack.c.h.b16 %v1451
    %v1743 = vunpack.c.l.b16 %v1452
    %v1744 = vunpack.c.h.b16 %v1452
    %v1745 = vunpack.c.l.b16 %v1453
    %v1746 = vunpack.c.h.b16 %v1453
    %v1747 = vunpack.c.l.b16 %v1454
    %v1748 = vunpack.c.h.b16 %v1454
    %v1749 = vunpack.c.l.b16 %v1455
    %v1750 = vunpack.c.h.b16 %v1455
    %v1751 = vunpack.c.l.b16 %v1456
    %v1752 = vunpack.c.h.b16 %v1456
    %v1753 = vunpack.c.l.b16 %v1457
    %v1754 = vunpack.c.h.b16 %v1457
    %v1755 = vunpack.c.l.b16 %v1458
    %v1756 = vunpack.c.h.b16 %v1458
    %v1757 = vunpack.c.l.b16 %v1459
    %v1758 = vunpack.c.h.b16 %v1459
    %v1759 = vunpack.c.l.b16 %v1460
    %v1760 = vunpack.c.h.b16 %v1460
    %v1761 = vunpack.c.l.b16 %v1461
    %v1762 = vunpack.c.h.b16 %v1461
    %v1763 = vunpack.c.l.b16 %v1462
    %v1764 = vunpack.c.h.b16 %v1462
    %v1765 = vunpack.c.l.b16 %v1463
    %v1766 = vunpack.c.h.b16 %v1463
    %v1767 = vunpack.c.l.b16 %v1464
    %v1768 = vunpack.c.h.b16 %v1464
    %v1769 = vunpack.c.l.b16 %v1465
    %v1770 = vunpack.c.h.b16 %v1465
    %v1771 = vunpack.c.l.b16 %v1466
    %v1772 = vunpack.c.h.b16 %v1466
    %v1773 = vunpack.c.l.b16 %v1467
    %v1774 = vunpack.c.h.b16 %v1467
    %v1775 = vunpack.c.l.b16 %v1468
    %v1776 = vunpack.c.h.b16 %v1468
    %v1777 = vunpack.c.l.b16 %v1469
    %v1778 = vunpack.c.h.b16 %v1469
    %v1779 = vunpack.c.l.b16 %v1470
    %v1780 = vunpack.c.h.b16 %v1470
    %v1781 = vunpack.c.l.b16 %v1471
    %v1782 = vunpack.c.h.b16 %v1471
    %v1783 = vunpack.c.l.b16 %v1472
    %v1784 = vunpack.c.h.b16 %v1472
    %v1785 = vunpack.c.l.b16 %v1473
    %v1786 = vunpack.c.h.b16 %v1473
    %v1787 = vunpack.c.l.b16 %v1474
    %v1788 = vunpack.c.h.b16 %v1474
    %v1789 = vunpack.c.l.b16 %v1475
    %v1790 = vunpack.c.h.b16 %v1475
    %v1791 = vunpack.c.l.b16 %v1476
    %v1792 = vunpack.c.h.b16 %v1476
    %v1793 = vunpack.c.l.b16 %v1477
    %v1794 = vunpack.c.h.b16 %v1477
    %v1795 = vunpack.c.l.b16 %v1478
    %v1796 = vunpack.c.h.b16 %v1478
    %v1797 = vunpack.c.l.b16 %v1479
    %v1798 = vunpack.c.h.b16 %v1479
    %v1799 = vunpack.c.l.b16 %v1480
    %v1800 = vunpack.c.h.b16 %v1480
    %v1801 = vunpack.c.l.b16 %v1481
    %v1802 = vunpack.c.h.b16 %v1481
    %v1803 = vunpack.c.l.b16 %v1482
    %v1804 = vunpack.c.h.b16 %v1482
    %v1805 = vunpack.c.l.b16 %v1483
    %v1806 = vunpack.c.h.b16 %v1483
    %v1807 = vunpack.c.l.b16 %v1484
    %v1808 = vunpack.c.h.b16 %v1484
    %v1809 = vunpack.c.l.b16 %v1485
    %v1810 = vunpack.c.h.b16 %v1485
    %v1811 = vunpack.c.l.b16 %v1486
    %v1812 = vunpack.c.h.b16 %v1486
    %v1813 = vunpack.c.l.b16 %v1487
    %v1814 = vunpack.c.h.b16 %v1487
    %v1815 = vunpack.c.l.b16 %v1488
    %v1816 = vunpack.c.h.b16 %v1488
    %v1817 = vunpack.c.l.b16 %v1489
    %v1818 = vunpack.c.h.b16 %v1489
    %v1819 = vunpack.c.l.b16 %v1490
    %v1820 = vunpack.c.h.b16 %v1490
    %v1821 = vunpack.c.l.b16 %v1491
    %v1822 = vunpack.c.h.b16 %v1491
    %v1823 = vunpack.c.l.b16 %v1492
    %v1824 = vunpack.c.h.b16 %v1492
    %v1825 = vunpack.c.l.b16 %v1493
    %v1826 = vunpack.c.h.b16 %v1493
    %v1827 = vunpack.c.l.b16 %v1494
    %v1828 = vunpack.c.h.b16 %v1494
    %v1829 = vunpack.c.l.b16 %v1495
    %v1830 = vunpack.c.h.b16 %v1495
    %v1831 = vunpack.c.l.b16 %v1496
    %v1832 = vunpack.c.h.b16 %v1496
    %v1833 = vunpack.c.l.b16 %v1497
    %v1834 = vunpack.c.h.b16 %v1497
    %v1835 = vunpack.c.l.b16 %v1498
    %v1836 = vunpack.c.h.b16 %v1498
    %v1837 = vunpack.c.l.b16 %v1499
    %v1838 = vunpack.c.h.b16 %v1499
    %v1839 = vunpack.c.l.b16 %v1500
    %v1840 = vunpack.c.h.b16 %v1500
    %v1841 = vunpack.c.l.b16 %v1501
    %v1842 = vunpack.c.h.b16 %v1501
    %v1843 = vunpack.c.l.b16 %v1502
    %v1844 = vunpack.c.h.b16 %v1502
    %v1845 = vunpack.c.l.b16 %v1503
    %v1846 = vunpack.c.h.b16 %v1503
    %v1847 = vunpack.c.l.b16 %v1504
    %v1848 = vunpack.c.h.b16 %v1504
    %v1849 = vunpack.c.l.b16 %v1505
    %v1850 = vunpack.c.h.b16 %v1505
    %v1851 = vunpack.c.l.b16 %v1506
    %v1852 = vunpack.c.h.b16 %v1506
    %v1853 = vunpack.c.l.b16 %v1507
    %v1854 = vunpack.c.h.b16 %v1507
    %v1855 = vunpack.c.l.b16 %v1508
    %v1856 = vunpack.c.h.b16 %v1508
    %v1857 = vunpack.c.l.b16 %v1509
    %v1858 = vunpack.c.h.b16 %v1509
    %v1859 = vunpack.c.l.b16 %v1510
    %v1860 = vunpack.c.h.b16 %v1510
    %v1861 = vunpack.c.l.b16 %v1511
    %v1862 = vunpack.c.h.b16 %v1511
    %v1863 = vunpack.c.l.b16 %v1512
    %v1864 = vunpack.c.h.b16 %v1512
    %v1865 = vunpack.c.l.b16 %v1513
    %v1866 = vunpack.c.h.b16 %v1513
    %v1867 = vunpack.c.l.b16 %v1514
    %v1868 = vunpack.c.h.b16 %v1514
    %v1869 = vunpack.c.l.b16 %v1515
    %v1870 = vunpack.c.h.b16 %v1515
    %v1871 = vunpack.c.l.b16 %v1516
    %v1872 = vunpack.c.h.b16 %v1516
    %v1873 = vunpack.c.l.b16 %v1517
    %v1874 = vunpack.c.h.b16 %v1517
    %v1875 = vunpack.c.l.b16 %v1518
    %v1876 = vunpack.c.h.b16 %v1518
    %v1877 = vunpack.c.l.b16 %v1519
    %v1878 = vunpack.c.h.b16 %v1519
    %v1879 = vunpack.c.l.b16 %v1520
    %v1880 = vunpack.c.h.b16 %v1520
    %v1881 = vunpack.c.l.b16 %v1521
    %v1882 = vunpack.c.h.b16 %v1521
    %v1883 = vunpack.c.l.b16 %v1522
    %v1884 = vunpack.c.h.b16 %v1522
    %v1885 = vunpack.c.l.b16 %v1523
    %v1886 = vunpack.c.h.b16 %v1523
    %v1887 = vunpack.c.l.b16 %v1524
    %v1888 = vunpack.c.h.b16 %v1524
    %v1889 = vunpack.c.l.b16 %v1525
    %v1890 = vunpack.c.h.b16 %v1525
    %v1891 = vunpack.c.l.b16 %v1526
    %v1892 = vunpack.c.h.b16 %v1526
    %v1893 = vunpack.c.l.b16 %v1527
    %v1894 = vunpack.c.h.b16 %v1527
    %v1895 = vunpack.c.l.b16 %v1528
    %v1896 = vunpack.c.h.b16 %v1528
    %v1897 = vunpack.c.l.b16 %v1529
    %v1898 = vunpack.c.h.b16 %v1529
    %v1899 = vunpack.c.l.b16 %v1530
    %v1900 = vunpack.c.h.b16 %v1530
    %v1901 = vunpack.c.l.b16 %v1531
    %v1902 = vunpack.c.h.b16 %v1531
    %v1903 = vunpack.c.l.b16 %v1532
    %v1904 = vunpack.c.h.b16 %v1532
    %v1905 = vunpack.c.l.b16 %v1533
    %v1906 = vunpack.c.h.b16 %v1533
    %v1907 = vunpack.c.l.b16 %v1534
    %v1908 = vunpack.c.h.b16 %v1534
    %v1909 = vunpack.c.l.b16 %v1535
    %v1910 = vunpack.c.h.b16 %v1535
    %v1911 = vunpack.c.l.b16 %v1536
    %v1912 = vunpack.c.h.b16 %v1536
    %v1913 = vunpack.c.l.b16 %v1537
    %v1914 = vunpack.c.h.b16 %v1537
    %v1915 = vunpack.c.l.b16 %v1538
    %v1916 = vunpack.c.h.b16 %v1538
    %v1917 = vunpack.c.l.b16 %v1539
    %v1918 = vunpack.c.h.b16 %v1539
    %v1919 = vunpack.c.l.b16 %v1540
    %v1920 = vunpack.c.h.b16 %v1540
    %v1921 = vunpack.c.l.b16 %v1541
    %v1922 = vunpack.c.h.b16 %v1541
    %v1923 = vunpack.c.l.b16 %v1542
    %v1924 = vunpack.c.h.b16 %v1542
    %v1925 = vunpack.c.l.b16 %v1543
    %v1926 = vunpack.c.h.b16 %v1543
    %v1927 = vunpack.c.l.b16 %v1544
    %v1928 = vunpack.c.h.b16 %v1544
    %v1929 = vunpack.c.l.b16 %v1545
    %v1930 = vunpack.c.h.b16 %v1545
    %v1931 = vunpack.c.l.b16 %v1546
    %v1932 = vunpack.c.h.b16 %v1546
    %v1933 = vunpack.c.l.b16 %v1547
    %v1934 = vunpack.c.h.b16 %v1547
    %v1935 = vunpack.c.l.b16 %v1548
    %v1936 = vunpack.c.h.b16 %v1548
    %v1937 = vunpack.c.l.b16 %v1549
    %v1938 = vunpack.c.h.b16 %v1549
    %v1939 = vunpack.c.l.b16 %v1550
    %v1940 = vunpack.c.h.b16 %v1550
    %v1941 = vunpack.c.l.b16 %v1551
    %v1942 = vunpack.c.h.b16 %v1551
    %v1943 = vunpack.c.l.b16 %v1552
    %v1944 = vunpack.c.h.b16 %v1552
    %v1945 = vunpack.c.l.b16 %v1553
    %v1946 = vunpack.c.h.b16 %v1553
    %v1947 = vunpack.c.l.b16 %v1554
    %v1948 = vunpack.c.h.b16 %v1554
    %v1949 = vunpack.c.l.b16 %v1555
    %v1950 = vunpack.c.h.b16 %v1555
    %v1951 = vunpack.c.l.b16 %v1556
    %v1952 = vunpack.c.h.b16 %v1556
    %v1953 = vunpack.c.l.b16 %v1557
    %v1954 = vunpack.c.h.b16 %v1557
    %v1955 = vunpack.c.l.b16 %v1558
    %v1956 = vunpack.c.h.b16 %v1558
    %v1957 = vunpack.c.l.b16 %v1559
    %v1958 = vunpack.c.h.b16 %v1559
    %v1959 = vunpack.c.l.b16 %v1560
    %v1960 = vunpack.c.h.b16 %v1560
    %v1961 = vunpack.c.l.b16 %v1561
    %v1962 = vunpack.c.h.b16 %v1561
    %v1963 = vunpack.c.l.b16 %v1562
    %v1964 = vunpack.c.h.b16 %v1562
    %v1965 = vunpack.c.l.b16 %v1563
    %v1966 = vunpack.c.h.b16 %v1563
    %v1967 = vunpack.c.l.b16 %v1564
    %v1968 = vunpack.c.h.b16 %v1564
    %v1969 = vunpack.c.l.b16 %v1565
    %v1970 = vunpack.c.h.b16 %v1565
    %v1971 = vpack.c.b16 %v1719, %v1715
    %v1972 = vpack.c.b16 %v1720, %v1716
    %v1973 = vpack.c.b16 %v1721, %v1717
    %v1974 = vpack.c.b16 %v1722, %v1718
    %v1975 = vpack.c.b16 %v1727, %v1723
    %v1976 = vpack.c.b16 %v1728, %v1724
    %v1977 = vpack.c.b16 %v1729, %v1725
    %v1978 = vpack.c.b16 %v1730, %v1726
    %v1979 = vpack.c.b16 %v1735, %v1731
    %v1980 = vpack.c.b16 %v1736, %v1732
    %v1981 = vpack.c.b16 %v1737, %v1733
    %v1982 = vpack.c.b16 %v1738, %v1734
    %v1983 = vpack.c.b16 %v1743, %v1739
    %v1984 = vpack.c.b16 %v1744, %v1740
    %v1985 = vpack.c.b16 %v1745, %v1741
    %v1986 = vpack.c.b16 %v1746, %v1742
    %v1987 = vpack.c.b16 %v1751, %v1747
    %v1988 = vpack.c.b16 %v1752, %v1748
    %v1989 = vpack.c.b16 %v1753, %v1749
    %v1990 = vpack.c.b16 %v1754, %v1750
    %v1991 = vpack.c.b16 %v1759, %v1755
    %v1992 = vpack.c.b16 %v1760, %v1756
    %v1993 = vpack.c.b16 %v1761, %v1757
    %v1994 = vpack.c.b16 %v1762, %v1758
    %v1995 = vpack.c.b16 %v1767, %v1763
    %v1996 = vpack.c.b16 %v1768, %v1764
    %v1997 = vpack.c.b16 %v1769, %v1765
    %v1998 = vpack.c.b16 %v1770, %v1766
    %v1999 = vpack.c.b16 %v1775, %v1771
    %v2000 = vpack.c.b16 %v1776, %v1772
    %v2001 = vpack.c.b16 %v1777, %v1773
    %v2002 = vpack.c.b16 %v1778, %v1774
    %v2003 = vpack.c.b16 %v1783, %v1779
    %v2004 = vpack.c.b16 %v1784, %v1780
    %v2005 = vpack.c.b16 %v1785, %v1781
    %v2006 = vpack.c.b16 %v1786, %v1782
    %v2007 = vpack.c.b16 %v1791, %v1787
    %v2008 = vpack.c.b16 %v1792, %v1788
    %v2009 = vpack.c.b16 %v1793, %v1789
    %v2010 = vpack.c.b16 %v1794, %v1790
    %v2011 = vpack.c.b16 %v1799, %v1795
    %v2012 = vpack.c.b16 %v1800, %v1796
    %v2013 = vpack.c.b16 %v1801, %v1797
    %v2014 = vpack.c.b16 %v1802, %v1798
    %v2015 = vpack.c.b16 %v1807, %v1803
    %v2016 = vpack.c.b16 %v1808, %v1804
    %v2017 = vpack.c.b16 %v1809, %v1805
    %v2018 = vpack.c.b16 %v1810, %v1806
    %v2019 = vpack.c.b16 %v1815, %v1811
    %v2020 = vpack.c.b16 %v1816, %v1812
    %v2021 = vpack.c.b16 %v1817, %v1813
    %v2022 = vpack.c.b16 %v1818, %v1814
    %v2023 = vpack.c.b16 %v1823, %v1819
    %v2024 = vpack.c.b16 %v1824, %v1820
    %v2025 = vpack.c.b16 %v1825, %v1821
    %v2026 = vpack.c.b16 %v1826, %v1822
    %v2027 = vpack.c.b16 %v1831, %v1827
    %v2028 = vpack.c.b16 %v1832, %v1828
    %v2029 = vpack.c.b16 %v1833, %v1829
    %v2030 = vpack.c.b16 %v1834, %v1830
    %v2031 = vpack.c.b16 %v1839, %v1835
    %v2032 = vpack.c.b16 %v1840, %v1836
    %v2033 = vpack.c.b16 %v1841, %v1837
    %v2034 = vpack.c.b16 %v1842, %v1838
    %v2035 = vpack.c.b16 %v1847, %v1843
    %v2036 = vpack.c.b16 %v1848, %v1844
    %v2037 = vpack.c.b16 %v1849, %v1845
    %v2038 = vpack.c.b16 %v1850, %v1846
    %v2039 = vpack.c.b16 %v1855, %v1851
    %v2040 = vpack.c.b16 %v1856, %v1852
    %v2041 = vpack.c.b16 %v1857, %v1853
    %v2042 = vpack.c.b16 %v1858, %v1854
    %v2043 = vpack.c.b16 %v1863, %v1859
    %v2044 = vpack.c.b16 %v1864, %v1860
    %v2045 = vpack.c.b16 %v1865, %v1861
    %v2046 = vpack.c.b16 %v1866, %v1862
    %v2047 = vpack.c.b16 %v1871, %v1867
    %v2048 = vpack.c.b16 %v1872, %v1868
    %v2049 = vpack.c.b16 %v1873, %v1869
    %v2050 = vpack.c.b16 %v1874, %v1870
    %v2051 = vpack.c.b16 %v1879, %v1875
    %v2052 = vpack.c.b16 %v1880, %v1876
    %v2053 = vpack.c.b16 %v1881, %v1877
    %v2054 = vpack.c.b16 %v1882, %v1878
    %v2055 = vpack.c.b16 %v1887, %v1883
    %v2056 = vpack.c.b16 %v1888, %v1884
    %v2057 = vpack.c.b16 %v1889, %v1885
    %v2058 = vpack.c.b16 %v1890, %v1886
    %v2059 = vpack.c.b16 %v1895, %v1891
    %v2060 = vpack.c.b16 %v1896, %v1892
    %v2061 = vpack.c.b16 %v1897, %v1893
    %v2062 = vpack.c.b16 %v1898, %v1894
    %v2063 = vpack.c.b16 %v1903, %v1899
    %v2064 = vpack.c.b16 %v1904, %v1900
    %v2065 = vpack.c.b16 %v1905, %v1901
    %v2066 = vpack.c.b16 %v1906, %v1902
    %v2067 = vpack.c.b16 %v1911, %v1907
    %v2068 = vpack.c.b16 %v1912, %v1908
    %v2069 = vpack.c.b16 %v1913, %v1909
    %v2070 = vpack.c.b16 %v1914, %v1910
    %v2071 = vpack.c.b16 %v1919, %v1915
    %v2072 = vpack.c.b16 %v1920, %v1916
    %v2073 = vpack.c.b16 %v1921, %v1917
    %v2074 = vpack.c.b16 %v1922, %v1918
    %v2075 = vpack.c.b16 %v1927, %v1923
    %v2076 = vpack.c.b16 %v1928, %v1924
    %v2077 = vpack.c.b16 %v1929, %v1925
    %v2078 = vpack.c.b16 %v1930, %v1926
    %v2079 = vpack.c.b16 %v1935, %v1931
    %v2080 = vpack.c.b16 %v1936, %v1932
    %v2081 = vpack.c.b16 %v1937, %v1933
    %v2082 = vpack.c.b16 %v1938, %v1934
    %v2083 = vpack.c.b16 %v1943, %v1939
    %v2084 = vpack.c.b16 %v1944, %v1940
    %v2085 = vpack.c.b16 %v1945, %v1941
    %v2086 = vpack.c.b16 %v1946, %v1942
    %v2087 = vpack.c.b16 %v1951, %v1947
    %v2088 = vpack.c.b16 %v1952, %v1948
    %v2089 = vpack.c.b16 %v1953, %v1949
    %v2090 = vpack.c.b16 %v1954, %v1950
    %v2091 = vpack.c.b16 %v1959, %v1955
    %v2092 = vpack.c.b16 %v1960, %v1956
    %v2093 = vpack.c.b16 %v1961, %v1957
    %v2094 = vpack.c.b16 %v1962, %v1958
    %v2095 = vpack.c.b16 %v1967, %v1963
    %v2096 = vpack.c.b16 %v1968, %v1964
    %v2097 = vpack.c.b16 %v1969, %v1965
    %v2098 = vpack.c.b16 %v1970, %v1966
    %2227 = vmatprep.subr.bf16.mxu0 %v1972
    %2228 = vmatpush1.bf16.msra.mxu0 %v1971
    %2229 = vmatprep.subr.bf16.mxu0 %v1976
    %2230 = vmatpush1.bf16.msra.mxu0 %v1975
    %2231 = vmatprep.subr.bf16.mxu0 %v1980
    %2232 = vmatpush1.bf16.msra.mxu0 %v1979
    %2233 = vmatprep.subr.bf16.mxu0 %v1984
    %2234 = vmatpush1.bf16.msra.mxu0 %v1983
    %2235 = vmatprep.subr.bf16.mxu0 %v1988
    %2236 = vmatpush1.bf16.msra.mxu0 %v1987
    %2237 = vmatprep.subr.bf16.mxu0 %v1992
    %2238 = vmatpush1.bf16.msra.mxu0 %v1991
    %2239 = vmatprep.subr.bf16.mxu0 %v1996
    %2240 = vmatpush1.bf16.msra.mxu0 %v1995
    %2241 = vmatprep.subr.bf16.mxu0 %v2000
    %2242 = vmatpush1.bf16.msra.mxu0 %v1999
    %2243 = vmatprep.subr.bf16.mxu0 %v2004
    %2244 = vmatpush1.bf16.msra.mxu0 %v2003
    %2245 = vmatprep.subr.bf16.mxu0 %v2008
    %2246 = vmatpush1.bf16.msra.mxu0 %v2007
    %2247 = vmatprep.subr.bf16.mxu0 %v2012
    %2248 = vmatpush1.bf16.msra.mxu0 %v2011
    %2249 = vmatprep.subr.bf16.mxu0 %v2016
    %2250 = vmatpush1.bf16.msra.mxu0 %v2015
    %2251 = vmatprep.subr.bf16.mxu0 %v2020
    %2252 = vmatpush1.bf16.msra.mxu0 %v2019
    %2253 = vmatprep.subr.bf16.mxu0 %v2024
    %2254 = vmatpush1.bf16.msra.mxu0 %v2023
    %2255 = vmatprep.subr.bf16.mxu0 %v2028
    %2256 = vmatpush1.bf16.msra.mxu0 %v2027
    %2257 = vmatprep.subr.bf16.mxu0 %v2032
    %2258 = vmatpush1.bf16.msra.mxu0 %v2031
    %2259 = vmatprep.mubr.bf16.mxu0 %v1435
    %2260 = vmatmul.mubr.bf16.gmra.mrb[0].mxu0 %v1434
    %v2261 = vpop.f32.mrb[0].mxu0
    %v2262 = vadd.f32 %v1570, %v2261
    %v2263 = vpop.f32.mrb[0].mxu0
    %v2264 = vadd.f32 %v1574, %v2263
    %v2265 = vpop.f32.mrb[0].mxu0
    %v2266 = vpop.f32.mrb[0].mxu0
    %2267 = vdwg.mxu0
    %2268 = vmatprep.subr.bf16.mxu0 %v2036
    %2269 = vmatpush1.bf16.msra.mxu0 %v2035
    %2270 = vmatprep.subr.bf16.mxu0 %v2040
    %2271 = vmatpush1.bf16.msra.mxu0 %v2039
    %2272 = vmatprep.subr.bf16.mxu0 %v2044
    %2273 = vmatpush1.bf16.msra.mxu0 %v2043
    %2274 = vmatprep.subr.bf16.mxu0 %v2048
    %2275 = vmatpush1.bf16.msra.mxu0 %v2047
    %2276 = vmatprep.subr.bf16.mxu0 %v2052
    %2277 = vmatpush1.bf16.msra.mxu0 %v2051
    %2278 = vmatprep.subr.bf16.mxu0 %v2056
    %2279 = vmatpush1.bf16.msra.mxu0 %v2055
    %2280 = vmatprep.subr.bf16.mxu0 %v2060
    %2281 = vmatpush1.bf16.msra.mxu0 %v2059
    %2282 = vmatprep.subr.bf16.mxu0 %v2064
    %2283 = vmatpush1.bf16.msra.mxu0 %v2063
    %2284 = vmatprep.subr.bf16.mxu0 %v2068
    %2285 = vmatpush1.bf16.msra.mxu0 %v2067
    %2286 = vmatprep.subr.bf16.mxu0 %v2072
    %2287 = vmatpush1.bf16.msra.mxu0 %v2071
    %2288 = vmatprep.subr.bf16.mxu0 %v2076
    %2289 = vmatpush1.bf16.msra.mxu0 %v2075
    %2290 = vmatprep.subr.bf16.mxu0 %v2080
    %2291 = vmatpush1.bf16.msra.mxu0 %v2079
    %2292 = vmatprep.subr.bf16.mxu0 %v2084
    %2293 = vmatpush1.bf16.msra.mxu0 %v2083
    %2294 = vmatprep.subr.bf16.mxu0 %v2088
    %2295 = vmatpush1.bf16.msra.mxu0 %v2087
    %2296 = vmatprep.subr.bf16.mxu0 %v2092
    %2297 = vmatpush1.bf16.msra.mxu0 %v2091
    %2298 = vmatprep.subr.bf16.mxu0 %v2096
    %2299 = vmatpush1.bf16.msra.mxu0 %v2095
    %2300 = vmatprep.mubr.bf16.mxu0 %v1437
    %2301 = vmatmul.mubr.bf16.gmra.mrb[0].mxu0 %v1436
    %v2302 = vpop.f32.mrb[0].mxu0
    %v2303 = vadd.f32 %v2262, %v2302
    %v2304 = vpop.f32.mrb[0].mxu0
    %v2305 = vadd.f32 %v2264, %v2304
    %v2306 = vpop.f32.mrb[0].mxu0
    %v2307 = vpop.f32.mrb[0].mxu0
    %2308 = vdwg.mxu0
    %2309 = vmatprep.subr.bf16.mxu0 %v1974
    %2310 = vmatpush1.bf16.msra.mxu0 %v1973
    %2311 = vmatprep.subr.bf16.mxu0 %v1978
    %2312 = vmatpush1.bf16.msra.mxu0 %v1977
    %2313 = vmatprep.subr.bf16.mxu0 %v1982
    %2314 = vmatpush1.bf16.msra.mxu0 %v1981
    %2315 = vmatprep.subr.bf16.mxu0 %v1986
    %2316 = vmatpush1.bf16.msra.mxu0 %v1985
    %2317 = vmatprep.subr.bf16.mxu0 %v1990
    %2318 = vmatpush1.bf16.msra.mxu0 %v1989
    %2319 = vmatprep.subr.bf16.mxu0 %v1994
    %2320 = vmatpush1.bf16.msra.mxu0 %v1993
    %2321 = vmatprep.subr.bf16.mxu0 %v1998
    %2322 = vmatpush1.bf16.msra.mxu0 %v1997
    %2323 = vmatprep.subr.bf16.mxu0 %v2002
    %2324 = vmatpush1.bf16.msra.mxu0 %v2001
    %2325 = vmatprep.subr.bf16.mxu0 %v2006
    %2326 = vmatpush1.bf16.msra.mxu0 %v2005
    %2327 = vmatprep.subr.bf16.mxu0 %v2010
    %2328 = vmatpush1.bf16.msra.mxu0 %v2009
    %2329 = vmatprep.subr.bf16.mxu0 %v2014
    %2330 = vmatpush1.bf16.msra.mxu0 %v2013
    %2331 = vmatprep.subr.bf16.mxu0 %v2018
    %2332 = vmatpush1.bf16.msra.mxu0 %v2017
    %2333 = vmatprep.subr.bf16.mxu0 %v2022
    %2334 = vmatpush1.bf16.msra.mxu0 %v2021
    %2335 = vmatprep.subr.bf16.mxu0 %v2026
    %2336 = vmatpush1.bf16.msra.mxu0 %v2025
    %2337 = vmatprep.subr.bf16.mxu0 %v2030
    %2338 = vmatpush1.bf16.msra.mxu0 %v2029
    %2339 = vmatprep.subr.bf16.mxu0 %v2034
    %2340 = vmatpush1.bf16.msra.mxu0 %v2033
    %2341 = vmatprep.mubr.bf16.mxu0 %v1435
    %2342 = vmatmul.mubr.bf16.gmra.mrb[0].mxu0 %v1434
    %v2343 = vpop.f32.mrb[0].mxu0
    %v2344 = vadd.f32 %v1578, %v2343
    %v2345 = vpop.f32.mrb[0].mxu0
    %v2346 = vadd.f32 %v1582, %v2345
    %v2347 = vpop.f32.mrb[0].mxu0
    %v2348 = vpop.f32.mrb[0].mxu0
    %2349 = vdwg.mxu0
    %2350 = vmatprep.subr.bf16.mxu0 %v2038
    %2351 = vmatpush1.bf16.msra.mxu0 %v2037
    %2352 = vmatprep.subr.bf16.mxu0 %v2042
    %2353 = vmatpush1.bf16.msra.mxu0 %v2041
    %2354 = vmatprep.subr.bf16.mxu0 %v2046
    %2355 = vmatpush1.bf16.msra.mxu0 %v2045
    %2356 = vmatprep.subr.bf16.mxu0 %v2050
    %2357 = vmatpush1.bf16.msra.mxu0 %v2049
    %2358 = vmatprep.subr.bf16.mxu0 %v2054
    %2359 = vmatpush1.bf16.msra.mxu0 %v2053
    %2360 = vmatprep.subr.bf16.mxu0 %v2058
    %2361 = vmatpush1.bf16.msra.mxu0 %v2057
    %2362 = vmatprep.subr.bf16.mxu0 %v2062
    %2363 = vmatpush1.bf16.msra.mxu0 %v2061
    %2364 = vmatprep.subr.bf16.mxu0 %v2066
    %2365 = vmatpush1.bf16.msra.mxu0 %v2065
    %2366 = vmatprep.subr.bf16.mxu0 %v2070
    %2367 = vmatpush1.bf16.msra.mxu0 %v2069
    %2368 = vmatprep.subr.bf16.mxu0 %v2074
    %2369 = vmatpush1.bf16.msra.mxu0 %v2073
    %2370 = vmatprep.subr.bf16.mxu0 %v2078
    %2371 = vmatpush1.bf16.msra.mxu0 %v2077
    %2372 = vmatprep.subr.bf16.mxu0 %v2082
    %2373 = vmatpush1.bf16.msra.mxu0 %v2081
    %2374 = vmatprep.subr.bf16.mxu0 %v2086
    %2375 = vmatpush1.bf16.msra.mxu0 %v2085
    %2376 = vmatprep.subr.bf16.mxu0 %v2090
    %2377 = vmatpush1.bf16.msra.mxu0 %v2089
    %2378 = vmatprep.subr.bf16.mxu0 %v2094
    %2379 = vmatpush1.bf16.msra.mxu0 %v2093
    %2380 = vmatprep.subr.bf16.mxu0 %v2098
    %2381 = vmatpush1.bf16.msra.mxu0 %v2097
    %2382 = vmatprep.mubr.bf16.mxu0 %v1437
    %2383 = vmatmul.mubr.bf16.gmra.mrb[0].mxu0 %v1436
    %v2384 = vpop.f32.mrb[0].mxu0
    %v2385 = vadd.f32 %v2344, %v2384
    %v2386 = vpop.f32.mrb[0].mxu0
    %v2387 = vadd.f32 %v2346, %v2386
    %v2388 = vpop.f32.mrb[0].mxu0
    %v2389 = vpop.f32.mrb[0].mxu0
    %2390 = vdwg.mxu0
    %v2391 = vmax.f32 %v2303, 0.0
    %v2392 = vmax.f32 %v2305, 0.0
    %v2393 = vmax.f32 %v2385, 0.0
    %v2394 = vmax.f32 %v2387, 0.0
    %v2395 = vpack.c.bf16 %v2391, %v2391
    %v2396 = vpack.c.bf16 %v2392, %v2392
    %v2397 = vpack.c.bf16 %v2393, %v2393
    %v2398 = vpack.c.bf16 %v2394, %v2394
    %v2399 = vld [vmem:[#allocation13] sm:$0xf]
    %v2400 = vld [vmem:[#allocation13 + $0x4] sm:$0xf]
    %v2401 = vld [vmem:[#allocation13 + $0x8] sm:$0xf]
    %v2402 = vld [vmem:[#allocation13 + $0xc] sm:$0xf]
    %v2403 = vld [vmem:[#allocation13 + $0x10] sm:$0xf]
    %v2404 = vld [vmem:[#allocation13 + $0x14] sm:$0xf]
    %v2405 = vld [vmem:[#allocation13 + $0x18] sm:$0xf]
    %v2406 = vld [vmem:[#allocation13 + $0x1c] sm:$0xf]
    %v2407 = vld [vmem:[#allocation13 + $0x20] sm:$0xf]
    %v2408 = vld [vmem:[#allocation13 + $0x24] sm:$0xf]
    %v2409 = vld [vmem:[#allocation13 + $0x28] sm:$0xf]
    %v2410 = vld [vmem:[#allocation13 + $0x2c] sm:$0xf]
    %v2411 = vld [vmem:[#allocation13 + $0x30] sm:$0xf]
    %v2412 = vld [vmem:[#allocation13 + $0x34] sm:$0xf]
    %v2413 = vld [vmem:[#allocation13 + $0x38] sm:$0xf]
    %v2414 = vld [vmem:[#allocation13 + $0x3c] sm:$0xf]
    %v2415 = vld [vmem:[#allocation13 + $0x40] sm:$0xf]
    %v2416 = vld [vmem:[#allocation13 + $0x44] sm:$0xf]
    %v2417 = vld [vmem:[#allocation13 + $0x48] sm:$0xf]
    %v2418 = vld [vmem:[#allocation13 + $0x4c] sm:$0xf]
    %v2419 = vld [vmem:[#allocation13 + $0x50] sm:$0xf]
    %v2420 = vld [vmem:[#allocation13 + $0x54] sm:$0xf]
    %v2421 = vld [vmem:[#allocation13 + $0x58] sm:$0xf]
    %v2422 = vld [vmem:[#allocation13 + $0x5c] sm:$0xf]
    %v2423 = vld [vmem:[#allocation13 + $0x60] sm:$0xf]
    %v2424 = vld [vmem:[#allocation13 + $0x64] sm:$0xf]
    %v2425 = vld [vmem:[#allocation13 + $0x68] sm:$0xf]
    %v2426 = vld [vmem:[#allocation13 + $0x6c] sm:$0xf]
    %v2427 = vld [vmem:[#allocation13 + $0x70] sm:$0xf]
    %v2428 = vld [vmem:[#allocation13 + $0x74] sm:$0xf]
    %v2429 = vld [vmem:[#allocation13 + $0x78] sm:$0xf]
    %v2430 = vld [vmem:[#allocation13 + $0x7c] sm:$0xf]
    %v2431 = vld [vmem:[#allocation13 + $0x80] sm:$0xf]
    %v2432 = vld [vmem:[#allocation13 + $0x84] sm:$0xf]
    %v2433 = vld [vmem:[#allocation13 + $0x88] sm:$0xf]
    %v2434 = vld [vmem:[#allocation13 + $0x8c] sm:$0xf]
    %v2435 = vld [vmem:[#allocation13 + $0x90] sm:$0xf]
    %v2436 = vld [vmem:[#allocation13 + $0x94] sm:$0xf]
    %v2437 = vld [vmem:[#allocation13 + $0x98] sm:$0xf]
    %v2438 = vld [vmem:[#allocation13 + $0x9c] sm:$0xf]
    %v2439 = vld [vmem:[#allocation13 + $0xa0] sm:$0xf]
    %v2440 = vld [vmem:[#allocation13 + $0xa4] sm:$0xf]
    %v2441 = vld [vmem:[#allocation13 + $0xa8] sm:$0xf]
    %v2442 = vld [vmem:[#allocation13 + $0xac] sm:$0xf]
    %v2443 = vld [vmem:[#allocation13 + $0xb0] sm:$0xf]
    %v2444 = vld [vmem:[#allocation13 + $0xb4] sm:$0xf]
    %v2445 = vld [vmem:[#allocation13 + $0xb8] sm:$0xf]
    %v2446 = vld [vmem:[#allocation13 + $0xbc] sm:$0xf]
    %v2447 = vld [vmem:[#allocation13 + $0xc0] sm:$0xf]
    %v2448 = vld [vmem:[#allocation13 + $0xc4] sm:$0xf]
    %v2449 = vld [vmem:[#allocation13 + $0xc8] sm:$0xf]
    %v2450 = vld [vmem:[#allocation13 + $0xcc] sm:$0xf]
    %v2451 = vld [vmem:[#allocation13 + $0xd0] sm:$0xf]
    %v2452 = vld [vmem:[#allocation13 + $0xd4] sm:$0xf]
    %v2453 = vld [vmem:[#allocation13 + $0xd8] sm:$0xf]
    %v2454 = vld [vmem:[#allocation13 + $0xdc] sm:$0xf]
    %v2455 = vld [vmem:[#allocation13 + $0xe0] sm:$0xf]
    %v2456 = vld [vmem:[#allocation13 + $0xe4] sm:$0xf]
    %v2457 = vld [vmem:[#allocation13 + $0xe8] sm:$0xf]
    %v2458 = vld [vmem:[#allocation13 + $0xec] sm:$0xf]
    %v2459 = vld [vmem:[#allocation13 + $0xf0] sm:$0xf]
    %v2460 = vld [vmem:[#allocation13 + $0xf4] sm:$0xf]
    %v2461 = vld [vmem:[#allocation13 + $0xf8] sm:$0xf]
    %v2462 = vld [vmem:[#allocation13 + $0xfc] sm:$0xf]
    %v2464 = vlaneseq
    %v2465 = vshrl.u32 %v2464, 7
    %v2466 = vsub.s32 0, %v2465
    %v2467 = vrot.slane %v131, %v2466
    %v2533 = vunpack.c.l.b16 %v2399
    %v2534 = vunpack.c.l.b16 %v2400
    %v2535 = vunpack.c.l.b16 %v2401
    %v2536 = vunpack.c.l.b16 %v2402
    %v2537 = vunpack.c.l.b16 %v2403
    %v2538 = vunpack.c.l.b16 %v2404
    %v2539 = vunpack.c.l.b16 %v2405
    %v2540 = vunpack.c.l.b16 %v2406
    %v2541 = vunpack.c.l.b16 %v2407
    %v2542 = vunpack.c.l.b16 %v2408
    %v2543 = vunpack.c.l.b16 %v2409
    %v2544 = vunpack.c.l.b16 %v2410
    %v2545 = vunpack.c.l.b16 %v2411
    %v2546 = vunpack.c.l.b16 %v2412
    %v2547 = vunpack.c.l.b16 %v2413
    %v2548 = vunpack.c.l.b16 %v2414
    %v2549 = vunpack.c.l.b16 %v2415
    %v2550 = vunpack.c.l.b16 %v2416
    %v2551 = vunpack.c.l.b16 %v2417
    %v2552 = vunpack.c.l.b16 %v2418
    %v2553 = vunpack.c.l.b16 %v2419
    %v2554 = vunpack.c.l.b16 %v2420
    %v2555 = vunpack.c.l.b16 %v2421
    %v2556 = vunpack.c.l.b16 %v2422
    %v2557 = vunpack.c.l.b16 %v2423
    %v2558 = vunpack.c.l.b16 %v2424
    %v2559 = vunpack.c.l.b16 %v2425
    %v2560 = vunpack.c.l.b16 %v2426
    %v2561 = vunpack.c.l.b16 %v2427
    %v2562 = vunpack.c.l.b16 %v2428
    %v2563 = vunpack.c.l.b16 %v2429
    %v2564 = vunpack.c.l.b16 %v2430
    %v2565 = vunpack.c.l.b16 %v2431
    %v2566 = vunpack.c.l.b16 %v2432
    %v2567 = vunpack.c.l.b16 %v2433
    %v2568 = vunpack.c.l.b16 %v2434
    %v2569 = vunpack.c.l.b16 %v2435
    %v2570 = vunpack.c.l.b16 %v2436
    %v2571 = vunpack.c.l.b16 %v2437
    %v2572 = vunpack.c.l.b16 %v2438
    %v2573 = vunpack.c.l.b16 %v2439
    %v2574 = vunpack.c.l.b16 %v2440
    %v2575 = vunpack.c.l.b16 %v2441
    %v2576 = vunpack.c.l.b16 %v2442
    %v2577 = vunpack.c.l.b16 %v2443
    %v2578 = vunpack.c.l.b16 %v2444
    %v2579 = vunpack.c.l.b16 %v2445
    %v2580 = vunpack.c.l.b16 %v2446
    %v2581 = vunpack.c.l.b16 %v2447
    %v2582 = vunpack.c.l.b16 %v2448
    %v2583 = vunpack.c.l.b16 %v2449
    %v2584 = vunpack.c.l.b16 %v2450
    %v2585 = vunpack.c.l.b16 %v2451
    %v2586 = vunpack.c.l.b16 %v2452
    %v2587 = vunpack.c.l.b16 %v2453
    %v2588 = vunpack.c.l.b16 %v2454
    %v2589 = vunpack.c.l.b16 %v2455
    %v2590 = vunpack.c.l.b16 %v2456
    %v2591 = vunpack.c.l.b16 %v2457
    %v2592 = vunpack.c.l.b16 %v2458
    %v2593 = vunpack.c.l.b16 %v2459
    %v2594 = vunpack.c.l.b16 %v2460
    %v2595 = vunpack.c.l.b16 %v2461
    %v2596 = vunpack.c.l.b16 %v2462
    %v2597 = vpack.c.b16 %v2534, %v2533
    %v2598 = vpack.c.b16 %v2536, %v2535
    %v2599 = vpack.c.b16 %v2538, %v2537
    %v2600 = vpack.c.b16 %v2540, %v2539
    %v2601 = vpack.c.b16 %v2542, %v2541
    %v2602 = vpack.c.b16 %v2544, %v2543
    %v2603 = vpack.c.b16 %v2546, %v2545
    %v2604 = vpack.c.b16 %v2548, %v2547
    %v2605 = vpack.c.b16 %v2550, %v2549
    %v2606 = vpack.c.b16 %v2552, %v2551
    %v2607 = vpack.c.b16 %v2554, %v2553
    %v2608 = vpack.c.b16 %v2556, %v2555
    %v2609 = vpack.c.b16 %v2558, %v2557
    %v2610 = vpack.c.b16 %v2560, %v2559
    %v2611 = vpack.c.b16 %v2562, %v2561
    %v2612 = vpack.c.b16 %v2564, %v2563
    %v2613 = vpack.c.b16 %v2566, %v2565
    %v2614 = vpack.c.b16 %v2568, %v2567
    %v2615 = vpack.c.b16 %v2570, %v2569
    %v2616 = vpack.c.b16 %v2572, %v2571
    %v2617 = vpack.c.b16 %v2574, %v2573
    %v2618 = vpack.c.b16 %v2576, %v2575
    %v2619 = vpack.c.b16 %v2578, %v2577
    %v2620 = vpack.c.b16 %v2580, %v2579
    %v2621 = vpack.c.b16 %v2582, %v2581
    %v2622 = vpack.c.b16 %v2584, %v2583
    %v2623 = vpack.c.b16 %v2586, %v2585
    %v2624 = vpack.c.b16 %v2588, %v2587
    %v2625 = vpack.c.b16 %v2590, %v2589
    %v2626 = vpack.c.b16 %v2592, %v2591
    %v2627 = vpack.c.b16 %v2594, %v2593
    %v2628 = vpack.c.b16 %v2596, %v2595
    %2661 = vmatprep.subr.bf16.mxu0 0
    %2662 = vmatpush1.bf16.msra.mxu0 %v2597
    %2663 = vmatprep.subr.bf16.mxu0 0
    %2664 = vmatpush1.bf16.msra.mxu0 %v2598
    %2665 = vmatprep.subr.bf16.mxu0 0
    %2666 = vmatpush1.bf16.msra.mxu0 %v2599
    %2667 = vmatprep.subr.bf16.mxu0 0
    %2668 = vmatpush1.bf16.msra.mxu0 %v2600
    %2669 = vmatprep.subr.bf16.mxu0 0
    %2670 = vmatpush1.bf16.msra.mxu0 %v2601
    %2671 = vmatprep.subr.bf16.mxu0 0
    %2672 = vmatpush1.bf16.msra.mxu0 %v2602
    %2673 = vmatprep.subr.bf16.mxu0 0
    %2674 = vmatpush1.bf16.msra.mxu0 %v2603
    %2675 = vmatprep.subr.bf16.mxu0 0
    %2676 = vmatpush1.bf16.msra.mxu0 %v2604
    %2677 = vmatprep.subr.bf16.mxu0 0
    %2678 = vmatpush1.bf16.msra.mxu0 %v2605
    %2679 = vmatprep.subr.bf16.mxu0 0
    %2680 = vmatpush1.bf16.msra.mxu0 %v2606
    %2681 = vmatprep.subr.bf16.mxu0 0
    %2682 = vmatpush1.bf16.msra.mxu0 %v2607
    %2683 = vmatprep.subr.bf16.mxu0 0
    %2684 = vmatpush1.bf16.msra.mxu0 %v2608
    %2685 = vmatprep.subr.bf16.mxu0 0
    %2686 = vmatpush1.bf16.msra.mxu0 %v2609
    %2687 = vmatprep.subr.bf16.mxu0 0
    %2688 = vmatpush1.bf16.msra.mxu0 %v2610
    %2689 = vmatprep.subr.bf16.mxu0 0
    %2690 = vmatpush1.bf16.msra.mxu0 %v2611
    %2691 = vmatprep.subr.bf16.mxu0 0
    %2692 = vmatpush1.bf16.msra.mxu0 %v2612
    %2693 = vmatprep.mubr.bf16.mxu0 %v2396
    %2694 = vmatmul.mubr.bf16.gmra.mrb[0].mxu0 %v2395
    %v2695 = vpop.f32.mrb[0].mxu0
    %v2696 = vadd.f32 %v2467, %v2695
    %v2697 = vpop.f32.mrb[0].mxu0
    %v2698 = vpop.f32.mrb[0].mxu0
    %v2699 = vpop.f32.mrb[0].mxu0
    %2700 = vdwg.mxu0
    %2701 = vmatprep.subr.bf16.mxu0 0
    %2702 = vmatpush1.bf16.msra.mxu0 %v2613
    %2703 = vmatprep.subr.bf16.mxu0 0
    %2704 = vmatpush1.bf16.msra.mxu0 %v2614
    %2705 = vmatprep.subr.bf16.mxu0 0
    %2706 = vmatpush1.bf16.msra.mxu0 %v2615
    %2707 = vmatprep.subr.bf16.mxu0 0
    %2708 = vmatpush1.bf16.msra.mxu0 %v2616
    %2709 = vmatprep.subr.bf16.mxu0 0
    %2710 = vmatpush1.bf16.msra.mxu0 %v2617
    %2711 = vmatprep.subr.bf16.mxu0 0
    %2712 = vmatpush1.bf16.msra.mxu0 %v2618
    %2713 = vmatprep.subr.bf16.mxu0 0
    %2714 = vmatpush1.bf16.msra.mxu0 %v2619
    %2715 = vmatprep.subr.bf16.mxu0 0
    %2716 = vmatpush1.bf16.msra.mxu0 %v2620
    %2717 = vmatprep.subr.bf16.mxu0 0
    %2718 = vmatpush1.bf16.msra.mxu0 %v2621
    %2719 = vmatprep.subr.bf16.mxu0 0
    %2720 = vmatpush1.bf16.msra.mxu0 %v2622
    %2721 = vmatprep.subr.bf16.mxu0 0
    %2722 = vmatpush1.bf16.msra.mxu0 %v2623
    %2723 = vmatprep.subr.bf16.mxu0 0
    %2724 = vmatpush1.bf16.msra.mxu0 %v2624
    %2725 = vmatprep.subr.bf16.mxu0 0
    %2726 = vmatpush1.bf16.msra.mxu0 %v2625
    %2727 = vmatprep.subr.bf16.mxu0 0
    %2728 = vmatpush1.bf16.msra.mxu0 %v2626
    %2729 = vmatprep.subr.bf16.mxu0 0
    %2730 = vmatpush1.bf16.msra.mxu0 %v2627
    %2731 = vmatprep.subr.bf16.mxu0 0
    %2732 = vmatpush1.bf16.msra.mxu0 %v2628
    %2733 = vmatprep.mubr.bf16.mxu0 %v2398
    %2734 = vmatmul.mubr.bf16.gmra.mrb[0].mxu0 %v2397
    %v2735 = vpop.f32.mrb[0].mxu0
    %v2736 = vadd.f32 %v2696, %v2735
    %v2737 = vpop.f32.mrb[0].mxu0
    %v2738 = vpop.f32.mrb[0].mxu0
    %v2739 = vpop.f32.mrb[0].mxu0
    %2740 = vdwg.mxu0
    %v2741 = vpack.c.bf16 %v2736, %v2736
    %2742 = vst [vmem:[#allocation14] sm:$0xf] %v2741
    %2743 = vst [vmem:[#allocation15] sm:$0xf] %v721
    // Predicated region
    $region62: #{tpu_custom_call.1} parent=1 // pred_check
      _
    $region63: #{tpu_custom_call.1} parent=1 // pred_check_branch
      %2745 = sbr.rel (0) target = $region65
    $region64: #{tpu_custom_call.1} parent=1 // pred_region
      %s2747 = ssub.s32 64, 64
      %2748 = vsyncadd [#allocation4], %s2747
      %s2750 = sshll.u32 [#allocation14], 4
      %s2751 = int_to_ptr.vmem [resolvable:$true] %s2750
      %2753 = dma.vmem_to_hbm [thread:$0]  %s2751, 64, %s8, [#allocation4]
    $region65: #{tpu_custom_call.1} parent=1 // pred_fallthru
      _
    // Predicated region
    $region66: #{tpu_custom_call.1} parent=1 // pred_check
      _
    $region67: #{tpu_custom_call.1} parent=1 // pred_check_branch
      %2755 = sbr.rel (0) target = $region69
    $region68: #{tpu_custom_call.1} parent=1 // pred_region
      %s2757 = ssub.s32 64, 64
      %2758 = vsyncadd [#allocation16], %s2757
      %s2760 = sshll.u32 [#allocation15], 4
      %s2761 = int_to_ptr.vmem [resolvable:$true] %s2760
      %2763 = dma.vmem_to_hbm [thread:$0]  %s2761, 64, %s9, [#allocation16]
    $region69: #{tpu_custom_call.1} parent=1 // pred_fallthru
      _
    // Predicated region
    $region70: #{tpu_custom_call.1} parent=1 // pred_check
      _
    $region71: #{tpu_custom_call.1} parent=1 // pred_check_branch
      %2765 = sbr.rel (0) target = $region73
    $region72: #{tpu_custom_call.1} parent=1 // pred_region
      %2766 = dma.done [#allocation4], 64
    $region73: #{tpu_custom_call.1} parent=1 // pred_fallthru
      _
    // Predicated region
    $region74: #{tpu_custom_call.1} parent=1 // pred_check
      _
    $region75: #{tpu_custom_call.1} parent=1 // pred_check_branch
      %2768 = sbr.rel (0) target = $region77
    $region76: #{tpu_custom_call.1} parent=1 // pred_region
      %2769 = dma.done [#allocation16], 64
    $region77: #{tpu_custom_call.1} parent=1 // pred_fallthru
      _
    %2770 = vsyncpa [#allocation3], 1
    %2771 = vsyncpa [#allocation6], 1
    %2772 = vsyncpa [#allocation9], 1
    %2773 = vsyncpa [#allocation12], 1
    %2774 = vsyncpa [#allocation4], 1
    %2775 = vsyncpa [#allocation16], 1

</llo_original>
